<compile_context>
chip_gen: v7x
topology: tpu7x:2x2x1
jax: 0.10.0
libtpu: 0.0.40
codegen_flags: <defaults>
</compile_context>

<pallas_src>
import jax
import jax.numpy as jnp
import numpy as np
from jax import lax
from jax.experimental import pallas as pl
from jax.experimental.pallas import tpu as pltpu


# ----------------------------- Pallas kernel -------------------------------

def rnn_kernel(xz_ref, len_ref, wd_ref,
               whh1_ref, w2_ref, b2_ref,
               wout_ref, bout_ref,
               out_ref,
               h1_ref, hc_ref, hx2_ref, cx2_ref, sel_ref):
    TC = xz_ref.shape[0]                 # time steps per chunk (static)
    K, BB, H = hc_ref.shape              # fractional depth, batch block, hidden
    NB = TC // K                         # K-step blocks per chunk (TC % K == 0)
    chunk = pl.program_id(1)
    nc = pl.num_programs(1)

    # ---- init recurrent state at the first time-chunk of each batch block ----
    @pl.when(chunk == 0)
    def _():
        h1_ref[...] = jnp.zeros_like(h1_ref)
        hc_ref[...] = jnp.zeros_like(hc_ref)
        hx2_ref[...] = jnp.zeros_like(hx2_ref)
        cx2_ref[...] = jnp.zeros_like(cx2_ref)
        sel_ref[...] = jnp.zeros_like(sel_ref)

    # ---- loop-invariant weight loads (no materialized broadcasts) ----
    whh1 = whh1_ref[...]                 # (H, 4H)
    w2 = w2_ref[...]                     # (2H, 4H) = [wih2; whh2]
    b2 = b2_ref[...]                     # (1, 4H)   sublane-broadcast in the add
    wd_v = wd_ref[...]                   # (K, H)
    wd_rows = [wd_v[m:m + 1, :] for m in range(K)]   # (1, H) rows, broadcast in-op
    lens = len_ref[...]                  # (BB, 1) int32
    t0 = chunk * TC

    sig = jax.nn.sigmoid

    # TODO(synk): nn.Dropout on inputs[t] is identity at inference and is not modeled.
    def block_body(blk, carry):
        h1, hx2, cx2, sel, hc = carry
        hc = list(hc)
        lt0 = pl.multiple_of(blk * K, K)          # chunk-local time of this K-block
        # K steps fully unrolled: circular-buffer slot / coefficient-rotation indices
        # are static because (chunk*TC + blk*K + kk) % K == kk.
        for kk in range(K):
            t = t0 + lt0 + kk                     # global time step (scalar)

            # -- MRNN_fixD_cell (reconstructed GL fractional-memory cell) --
            z1 = xz_ref[lt0 + kk] + jnp.dot(h1, whh1,
                                            preferred_element_type=jnp.float32)
            # full-width activations: 2 EUP passes instead of 4 quarter-utilized ones
            s1 = sig(z1)
            th1 = jnp.tanh(z1)
            i1 = s1[:, 0:H]
            f1 = s1[:, H:2 * H]
            o1 = s1[:, 3 * H:4 * H]
            g1 = th1[:, 2 * H:3 * H]

            # frac = sum_j wd[j] * c_{t-K+j}; slot m holds c with coeff wd[(m-kk)%K]
            frac = wd_rows[(0 - kk) % K] * hc[0]
            for m in range(1, K):
                frac = frac + wd_rows[(m - kk) % K] * hc[m]
            c_prev = hc[(kk - 1) % K]             # c_{t-1}
            c_new = i1 * g1 + f1 * c_prev - frac
            h1 = o1 * jnp.tanh(c_new)
            hc[kk] = c_new                        # static circular write (no shift)

            # -- nn.LSTMCell (fused recurrent matmul), then the module's hx2=tanh(hx2) --
            h12 = jnp.concatenate([h1, hx2], axis=-1)          # (BB, 2H)
            z2 = jnp.dot(h12, w2, preferred_element_type=jnp.float32) + b2
            s2 = sig(z2)
            th2 = jnp.tanh(z2)
            i2 = s2[:, 0:H]
            f2 = s2[:, H:2 * H]
            o2 = s2[:, 3 * H:4 * H]
            g2 = th2[:, 2 * H:3 * H]
            cx2 = f2 * cx2 + i2 * g2
            hx2 = jnp.tanh(o2 * jnp.tanh(cx2))

            # -- in-kernel selection of outputs[length[b], b] --
            sel = jnp.where(lens == t, hx2, sel)
        return h1, hx2, cx2, sel, tuple(hc)

    carry0 = (h1_ref[...], hx2_ref[...], cx2_ref[...], sel_ref[...],
              tuple(hc_ref[m] for m in range(K)))
    h1, hx2, cx2, sel, hc = lax.fori_loop(0, NB, block_body, carry0)

    # ---- write carried state back once per chunk ----
    h1_ref[...] = h1
    hx2_ref[...] = hx2
    cx2_ref[...] = cx2
    sel_ref[...] = sel
    for m in range(K):
        hc_ref[m] = hc[m]

    # ---- fused head: linear + log_softmax, only on the last time-chunk ----
    @pl.when(chunk == nc - 1)
    def _():
        logits = (jnp.dot(sel, wout_ref[...], preferred_element_type=jnp.float32)
                  + bout_ref[...])
        mx = jnp.max(logits, axis=1, keepdims=True)
        lse = jnp.log(jnp.sum(jnp.exp(logits - mx), axis=1, keepdims=True)) + mx
        out_ref[...] = logits - lse


# ------------------------------ wrapper ------------------------------------

def _cdiv(a, b):
    return -(-a // b)


def _num_tensorcores():
    # v7x has 2 TensorCores per chip; v5e/v6e have 1. Fall back to 1 if unknown.
    try:
        kind = jax.devices()[0].device_kind.lower()
        if "v7" in kind:
            return 2
    except Exception:
        pass
    return 1


def mrnn_fixd_forward(inputs, length, p):
    T, B, I = inputs.shape
    H = p["whh1"].shape[0]
    K = p["wd"].shape[0]
    O = p["w_out"].shape[1]
    G = 4 * H

    # ---- batch blocking: >=2 "parallel" blocks on multi-TC chips so megacore shards
    #      the recurrence; a single big block (<=256) on single-TC chips where the
    #      batch grid axis is just a serial loop. ----
    ncores = _num_tensorcores()
    Bpad8 = _cdiv(B, 8) * 8
    if ncores >= 2 and Bpad8 >= 16:
        BB = min(_cdiv(_cdiv(Bpad8, ncores), 8) * 8, 256)
    else:
        BB = min(Bpad8, 256)
    nb = _cdiv(Bpad8, BB)
    Bpad = nb * BB

    # ---- time chunking: multiple of K (static circular-buffer indices); cap so the
    #      double-buffered (TC, BB, 4H) input chunk stays ~<= 4 MiB (v7x VMEM-safe). ----
    vmem_budget = 4 * 1024 * 1024
    tc_cap = max(K, vmem_budget // (2 * BB * G * 4))
    TC = min(64, tc_cap, max(T, K))
    TC = max(K, (TC // K) * K)
    Tp = _cdiv(T, TC) * TC
    nc = Tp // TC

    # ---- pre-project inputs to gate space: one big XLA matmul, lane-dense 4H ----
    x = jnp.zeros((Tp, Bpad, I), jnp.float32).at[:T, :B].set(inputs.astype(jnp.float32))
    xz = (jnp.einsum("tbi,ig->tbg", x, p["wih1"],
                     precision=jax.lax.Precision.HIGHEST)
          + p["b1"][None])                                   # (Tp, Bpad, 4H)

    w2 = jnp.concatenate([p["wih2"], p["whh2"]], axis=0)     # (2H, 4H)

    # TODO(synk): lengths are treated as 0-based indices in [0, T-1], matching
    # outputs[length[i], i] in the PyTorch forward; clip guards OOB values.
    length = jnp.clip(length.astype(jnp.int32), 0, T - 1)
    len_pad = jnp.full((Bpad, 1), -1, jnp.int32).at[:B, 0].set(length)

    flops = 2 * Tp * Bpad * (H * G + 2 * H * G) + 2 * Bpad * H * O
    transcendentals = Tp * Bpad * (4 * G + 3 * H)
    bytes_accessed = 4 * (Tp * Bpad * G + Bpad + Bpad * O
                          + K * H + 3 * H * G + G + H * O + O)

    logp = pl.pallas_call(
        rnn_kernel,
        out_shape=jax.ShapeDtypeStruct((Bpad, O), jnp.float32),
        grid=(nb, nc),
        in_specs=[
            pl.BlockSpec((TC, BB, G), lambda b, c: (c, b, 0)),   # pre-projected inputs
            pl.BlockSpec((BB, 1), lambda b, c: (b, 0)),          # lengths
            pl.BlockSpec((K, H), lambda b, c: (0, 0)),           # wd (GL coefficients)
            pl.BlockSpec((H, G), lambda b, c: (0, 0)),           # whh1
            pl.BlockSpec((2 * H, G), lambda b, c: (0, 0)),       # [wih2; whh2] stacked
            pl.BlockSpec((1, G), lambda b, c: (0, 0)),           # b2
            pl.BlockSpec((H, O), lambda b, c: (0, 0)),           # w_out
            pl.BlockSpec((1, O), lambda b, c: (0, 0)),           # b_out
        ],
        out_specs=pl.BlockSpec((BB, O), lambda b, c: (b, 0)),
        scratch_shapes=[
            pltpu.VMEM((BB, H), jnp.float32),      # h1
            pltpu.VMEM((K, BB, H), jnp.float32),   # hc circular history
            pltpu.VMEM((BB, H), jnp.float32),      # hx2
            pltpu.VMEM((BB, H), jnp.float32),      # cx2
            pltpu.VMEM((BB, H), jnp.float32),      # sel (length-selected hidden)
        ],
        compiler_params=pltpu.CompilerParams(
            dimension_semantics=("parallel", "arbitrary")),
        cost_estimate=pl.CostEstimate(
            flops=int(flops),
            transcendentals=int(transcendentals),
            bytes_accessed=int(bytes_accessed)),
    )(xz, len_pad, p["wd"], p["whh1"], w2, p["b2"], p["w_out"], p["b_out"])

    return logp[:B]


# ------------------------- params / reference ------------------------------

def compute_wd(bd, K):
    # d = 0.5 * sigmoid(bd), then GL coefficients per hidden unit (module.get_wd).
    d = 0.5 * jax.nn.sigmoid(bd)                      # (1, H)
    w = [None] * (K + 1)
    w[K] = jnp.ones_like(d)
    for i in range(K):
        w[K - i - 1] = w[K - i] * (i - d) / (i + 1)
    return jnp.concatenate(w[:K], axis=0)             # (K, H)


def init_params(key, I, H, K, O):
    ks = jax.random.split(key, 9)
    s = 1.0 / np.sqrt(H)

    def u(k, shape):
        return jax.random.uniform(k, shape, jnp.float32, -s, s)

    # TODO(synk): the original module's bd1 is (1, input_size); the cell source is
    # unavailable, so GL coefficients are defined per hidden unit (bd zeros => fixed wd).
    bd = jnp.zeros((1, H), jnp.float32)
    return dict(
        wd=compute_wd(bd, K),                         # (K, H)
        wih1=u(ks[0], (I, 4 * H)),                    # fused (i,f,g,o) gates
        whh1=u(ks[1], (H, 4 * H)),
        b1=u(ks[2], (1, 4 * H)),
        wih2=u(ks[3], (H, 4 * H)),
        whh2=u(ks[4], (H, 4 * H)),
        b2=u(ks[5], (1, 4 * H)) + u(ks[6], (1, 4 * H)),  # b_ih + b_hh
        w_out=u(ks[7], (H, O)),
        b_out=u(ks[8], (1, O)),
    )


def ref_forward(inputs, length, p):
    """Pure-JAX reference with identical math (shift-based history), for checking."""
    T, B, _ = inputs.shape
    H = p["whh1"].shape[0]
    K = p["wd"].shape[0]
    h1 = jnp.zeros((B, H)); hc = jnp.zeros((K, B, H))
    hx2 = jnp.zeros((B, H)); cx2 = jnp.zeros((B, H))
    sig = jax.nn.sigmoid

    outs = []
    for t in range(T):
        x = inputs[t]
        z1 = x @ p["wih1"] + h1 @ p["whh1"] + p["b1"]
        i1 = sig(z1[:, 0:H]); f1 = sig(z1[:, H:2 * H])
        g1 = jnp.tanh(z1[:, 2 * H:3 * H]); o1 = sig(z1[:, 3 * H:4 * H])
        frac = jnp.sum(p["wd"][:, None, :] * hc, axis=0)
        c_new = i1 * g1 + f1 * hc[-1] - frac
        h1 = o1 * jnp.tanh(c_new)
        hc = jnp.concatenate([hc[1:], c_new[None]], axis=0)

        z2 = h1 @ p["wih2"] + hx2 @ p["whh2"] + p["b2"]
        i2 = sig(z2[:, 0:H]); f2 = sig(z2[:, H:2 * H])
        g2 = jnp.tanh(z2[:, 2 * H:3 * H]); o2 = sig(z2[:, 3 * H:4 * H])
        cx2 = f2 * cx2 + i2 * g2
        hx2 = jnp.tanh(o2 * jnp.tanh(cx2))
        outs.append(hx2)

    outputs = jnp.stack(outs, axis=0)
    sel = outputs[length, jnp.arange(B)]
    logits = sel @ p["w_out"] + p["b_out"]
    return jax.nn.log_softmax(logits, axis=1)


# --------------------------------- main -------------------------------------

if __name__ == "__main__":
    T, B, I, H, K, O = 8, 2, 8, 32, 4, 5   # time, batch, input, hidden, K, classes
    key = jax.random.PRNGKey(0)
    kp, kx = jax.random.split(key)

    params = init_params(kp, I, H, K, O)
    inputs = jax.random.normal(kx, (T, B, I), jnp.float32)
    length = jnp.array([T - 1, T // 2], dtype=jnp.int32)

    out = mrnn_fixd_forward(inputs, length, params)
    out = jax.block_until_ready(out)

    ref = ref_forward(inputs, length, params)
    np.testing.assert_allclose(np.asarray(out), np.asarray(ref),
                               atol=2e-5, rtol=2e-5)
    print("KERNEL_OK")
</pallas_src>

<mosaic_0001>
module attributes {stable_mosaic.version = 11 : i64} {
  func.func @rnn_kernel(%arg0: i32, %arg1: i32, %arg2: memref<8x8x128xf32, #tpu.memory_space<vmem>>, %arg3: memref<8x1xi32, #tpu.memory_space<vmem>>, %arg4: memref<4x32xf32, #tpu.memory_space<vmem>>, %arg5: memref<32x128xf32, #tpu.memory_space<vmem>>, %arg6: memref<64x128xf32, #tpu.memory_space<vmem>>, %arg7: memref<1x128xf32, #tpu.memory_space<vmem>>, %arg8: memref<32x5xf32, #tpu.memory_space<vmem>>, %arg9: memref<1x5xf32, #tpu.memory_space<vmem>>, %arg10: memref<8x5xf32, #tpu.memory_space<vmem>>, %arg11: memref<8x32xf32, #tpu.memory_space<vmem>>, %arg12: memref<4x8x32xf32, #tpu.memory_space<vmem>>, %arg13: memref<8x32xf32, #tpu.memory_space<vmem>>, %arg14: memref<8x32xf32, #tpu.memory_space<vmem>>, %arg15: memref<8x32xf32, #tpu.memory_space<vmem>>) attributes {dimension_semantics = [#tpu.dimension_semantics<parallel>, #tpu.dimension_semantics<arbitrary>], iteration_bounds = array<i64: 1, 1>, scalar_prefetch = 0 : i64, scratch_operands = 5 : i64, tpu.core_type = #tpu.core_type<tc>, window_params = [{transform_indices = @transform_0, window_bounds = array<i64: 8, 8, 128>}, {transform_indices = @transform_1, window_bounds = array<i64: 8, 1>}, {pipeline_mode = #tpu.pipeline_mode<synchronous>, transform_indices = @transform_2, window_bounds = array<i64: 4, 32>}, {pipeline_mode = #tpu.pipeline_mode<synchronous>, transform_indices = @transform_3, window_bounds = array<i64: 32, 128>}, {pipeline_mode = #tpu.pipeline_mode<synchronous>, transform_indices = @transform_4, window_bounds = array<i64: 64, 128>}, {pipeline_mode = #tpu.pipeline_mode<synchronous>, transform_indices = @transform_5, window_bounds = array<i64: 1, 128>}, {pipeline_mode = #tpu.pipeline_mode<synchronous>, transform_indices = @transform_6, window_bounds = array<i64: 32, 5>}, {pipeline_mode = #tpu.pipeline_mode<synchronous>, transform_indices = @transform_7, window_bounds = array<i64: 1, 5>}, {transform_indices = @transform_8, window_bounds = array<i64: 8, 5>}]} {
    %c0_i32 = arith.constant 0 : i32
    %0 = arith.cmpi eq, %arg1, %c0_i32 : i32
    %1 = arith.extui %0 : i1 to i32
    %c0_i32_0 = arith.constant 0 : i32
    %2 = arith.cmpi ne, %1, %c0_i32_0 : i32
    scf.if %2 {
      %cst = arith.constant 0.000000e+00 : f32
      %46 = vector.broadcast %cst : f32 to vector<8x32xf32>
      %c0_51 = arith.constant 0 : index
      %c0_52 = arith.constant 0 : index
      %47 = vector.load %arg11[%c0_51, %c0_52] : memref<8x32xf32, #tpu.memory_space<vmem>>, vector<8x32xf32>
      tpu.vector_store %arg11[%c0_51, %c0_52], %46 {strides = array<i32>} : memref<8x32xf32, #tpu.memory_space<vmem>>, vector<8x32xf32>,
      %cst_53 = arith.constant 0.000000e+00 : f32
      %48 = vector.broadcast %cst_53 : f32 to vector<4x8x32xf32>
      %c0_54 = arith.constant 0 : index
      %c0_55 = arith.constant 0 : index
      %c0_56 = arith.constant 0 : index
      %49 = vector.load %arg12[%c0_54, %c0_55, %c0_56] : memref<4x8x32xf32, #tpu.memory_space<vmem>>, vector<4x8x32xf32>
      tpu.vector_store %arg12[%c0_54, %c0_55, %c0_56], %48 {strides = array<i32>} : memref<4x8x32xf32, #tpu.memory_space<vmem>>, vector<4x8x32xf32>,
      %cst_57 = arith.constant 0.000000e+00 : f32
      %50 = vector.broadcast %cst_57 : f32 to vector<8x32xf32>
      %c0_58 = arith.constant 0 : index
      %c0_59 = arith.constant 0 : index
      %51 = vector.load %arg13[%c0_58, %c0_59] : memref<8x32xf32, #tpu.memory_space<vmem>>, vector<8x32xf32>
      tpu.vector_store %arg13[%c0_58, %c0_59], %50 {strides = array<i32>} : memref<8x32xf32, #tpu.memory_space<vmem>>, vector<8x32xf32>,
      %cst_60 = arith.constant 0.000000e+00 : f32
      %52 = vector.broadcast %cst_60 : f32 to vector<8x32xf32>
      %c0_61 = arith.constant 0 : index
      %c0_62 = arith.constant 0 : index
      %53 = vector.load %arg14[%c0_61, %c0_62] : memref<8x32xf32, #tpu.memory_space<vmem>>, vector<8x32xf32>
      tpu.vector_store %arg14[%c0_61, %c0_62], %52 {strides = array<i32>} : memref<8x32xf32, #tpu.memory_space<vmem>>, vector<8x32xf32>,
      %cst_63 = arith.constant 0.000000e+00 : f32
      %54 = vector.broadcast %cst_63 : f32 to vector<8x32xf32>
      %c0_64 = arith.constant 0 : index
      %c0_65 = arith.constant 0 : index
      %55 = vector.load %arg15[%c0_64, %c0_65] : memref<8x32xf32, #tpu.memory_space<vmem>>, vector<8x32xf32>
      tpu.vector_store %arg15[%c0_64, %c0_65], %54 {strides = array<i32>} : memref<8x32xf32, #tpu.memory_space<vmem>>, vector<8x32xf32>,
    } else {
    }
    %c0 = arith.constant 0 : index
    %c0_1 = arith.constant 0 : index
    %3 = vector.load %arg5[%c0, %c0_1] : memref<32x128xf32, #tpu.memory_space<vmem>>, vector<32x128xf32>
    %c0_2 = arith.constant 0 : index
    %c0_3 = arith.constant 0 : index
    %4 = vector.load %arg6[%c0_2, %c0_3] : memref<64x128xf32, #tpu.memory_space<vmem>>, vector<64x128xf32>
    %c0_4 = arith.constant 0 : index
    %c0_5 = arith.constant 0 : index
    %5 = vector.load %arg7[%c0_4, %c0_5] : memref<1x128xf32, #tpu.memory_space<vmem>>, vector<1x128xf32>
    %c0_6 = arith.constant 0 : index
    %c0_7 = arith.constant 0 : index
    %6 = vector.load %arg4[%c0_6, %c0_7] : memref<4x32xf32, #tpu.memory_space<vmem>>, vector<4x32xf32>
    %7 = vector.extract_strided_slice %6 {offsets = [0, 0], sizes = [1, 32], strides = [1, 1]} : vector<4x32xf32> to vector<1x32xf32>
    %8 = vector.extract_strided_slice %6 {offsets = [1, 0], sizes = [1, 32], strides = [1, 1]} : vector<4x32xf32> to vector<1x32xf32>
    %9 = vector.extract_strided_slice %6 {offsets = [2, 0], sizes = [1, 32], strides = [1, 1]} : vector<4x32xf32> to vector<1x32xf32>
    %10 = vector.extract_strided_slice %6 {offsets = [3, 0], sizes = [1, 32], strides = [1, 1]} : vector<4x32xf32> to vector<1x32xf32>
    %c0_8 = arith.constant 0 : index
    %c0_9 = arith.constant 0 : index
    %11 = vector.load %arg3[%c0_8, %c0_9] : memref<8x1xi32, #tpu.memory_space<vmem>>, vector<8x1xi32>
    %c8_i32 = arith.constant 8 : i32
    %12 = arith.muli %arg1, %c8_i32 : i32
    %c0_10 = arith.constant 0 : index
    %c0_11 = arith.constant 0 : index
    %13 = vector.load %arg11[%c0_10, %c0_11] : memref<8x32xf32, #tpu.memory_space<vmem>>, vector<8x32xf32>
    %c0_12 = arith.constant 0 : index
    %c0_13 = arith.constant 0 : index
    %14 = vector.load %arg13[%c0_12, %c0_13] : memref<8x32xf32, #tpu.memory_space<vmem>>, vector<8x32xf32>
    %c0_14 = arith.constant 0 : index
    %c0_15 = arith.constant 0 : index
    %15 = vector.load %arg14[%c0_14, %c0_15] : memref<8x32xf32, #tpu.memory_space<vmem>>, vector<8x32xf32>
    %c0_16 = arith.constant 0 : index
    %c0_17 = arith.constant 0 : index
    %16 = vector.load %arg15[%c0_16, %c0_17] : memref<8x32xf32, #tpu.memory_space<vmem>>, vector<8x32xf32>
    %c0_18 = arith.constant 0 : index
    %c0_19 = arith.constant 0 : index
    %c0_20 = arith.constant 0 : index
    %17 = vector.load %arg12[%c0_18, %c0_19, %c0_20] : memref<4x8x32xf32, #tpu.memory_space<vmem>>, vector<1x8x32xf32>
    %18 = vector.shape_cast %17 : vector<1x8x32xf32> to vector<8x32xf32>
    %c1 = arith.constant 1 : index
    %c0_21 = arith.constant 0 : index
    %c0_22 = arith.constant 0 : index
    %19 = vector.load %arg12[%c1, %c0_21, %c0_22] : memref<4x8x32xf32, #tpu.memory_space<vmem>>, vector<1x8x32xf32>
    %20 = vector.shape_cast %19 : vector<1x8x32xf32> to vector<8x32xf32>
    %c2 = arith.constant 2 : index
    %c0_23 = arith.constant 0 : index
    %c0_24 = arith.constant 0 : index
    %21 = vector.load %arg12[%c2, %c0_23, %c0_24] : memref<4x8x32xf32, #tpu.memory_space<vmem>>, vector<1x8x32xf32>
    %22 = vector.shape_cast %21 : vector<1x8x32xf32> to vector<8x32xf32>
    %c3 = arith.constant 3 : index
    %c0_25 = arith.constant 0 : index
    %c0_26 = arith.constant 0 : index
    %23 = vector.load %arg12[%c3, %c0_25, %c0_26] : memref<4x8x32xf32, #tpu.memory_space<vmem>>, vector<1x8x32xf32>
    %24 = vector.shape_cast %23 : vector<1x8x32xf32> to vector<8x32xf32>
    %c0_i32_27 = arith.constant 0 : i32
    %c2_i32 = arith.constant 2 : i32
    %25 = arith.addi %c0_i32_27, %c2_i32 : i32
    %c1_i32 = arith.constant 1 : i32
    %26:8 = scf.for %arg16 = %c0_i32_27 to %25 step %c1_i32 iter_args(%arg17 = %13, %arg18 = %14, %arg19 = %15, %arg20 = %16, %arg21 = %18, %arg22 = %20, %arg23 = %22, %arg24 = %24) -> (vector<8x32xf32>, vector<8x32xf32>, vector<8x32xf32>, vector<8x32xf32>, vector<8x32xf32>, vector<8x32xf32>, vector<8x32xf32>, vector<8x32xf32>)  : i32 {
      %c4_i32 = arith.constant 4 : i32
      %46 = arith.muli %arg16, %c4_i32 : i32
      %47 = tpu.assume_multiple %46, 4 : i32
      %48 = arith.addi %12, %47 : i32
      %c0_i32_51 = arith.constant 0 : i32
      %49 = arith.addi %48, %c0_i32_51 : i32
      %c0_i32_52 = arith.constant 0 : i32
      %50 = arith.addi %47, %c0_i32_52 : i32
      %51 = arith.index_cast %50 : i32 to index
      %c0_53 = arith.constant 0 : index
      %c0_54 = arith.constant 0 : index
      %52 = vector.load %arg2[%51, %c0_53, %c0_54] : memref<8x8x128xf32, #tpu.memory_space<vmem>>, vector<1x8x128xf32>
      %53 = vector.shape_cast %52 : vector<1x8x128xf32> to vector<8x128xf32>
      %cst = arith.constant dense<0.000000e+00> : vector<8x128xf32>
      %54 = tpu.matmul %arg17, %3, %cst {dimension_numbers = #tpu.dot_dimension_numbers<[1], [0], [0], [1], [0, 0, 1, 1], [], []>} : vector<8x32xf32>, vector<32x128xf32>, vector<8x128xf32> -> vector<8x128xf32>
      %55 = arith.addf %53, %54 : vector<8x128xf32>
      %56 = arith.negf %55 : vector<8x128xf32>
      %57 = math.exp %56 : vector<8x128xf32>
      %cst_55 = arith.constant 1.000000e+00 : f32
      %58 = vector.broadcast %cst_55 : f32 to vector<8x128xf32>
      %59 = arith.addf %58, %57 : vector<8x128xf32>
      %60 = arith.divf %58, %59 : vector<8x128xf32>
      %61 = math.tanh %55 : vector<8x128xf32>
      %62 = vector.extract_strided_slice %60 {offsets = [0, 0], sizes = [8, 32], strides = [1, 1]} : vector<8x128xf32> to vector<8x32xf32>
      %63 = vector.extract_strided_slice %60 {offsets = [0, 32], sizes = [8, 32], strides = [1, 1]} : vector<8x128xf32> to vector<8x32xf32>
      %64 = vector.extract_strided_slice %60 {offsets = [0, 96], sizes = [8, 32], strides = [1, 1]} : vector<8x128xf32> to vector<8x32xf32>
      %65 = vector.extract_strided_slice %61 {offsets = [0, 64], sizes = [8, 32], strides = [1, 1]} : vector<8x128xf32> to vector<8x32xf32>
      %66 = vector.broadcast %7 : vector<1x32xf32> to vector<8x32xf32>
      %67 = arith.mulf %66, %arg21 : vector<8x32xf32>
      %68 = vector.broadcast %8 : vector<1x32xf32> to vector<8x32xf32>
      %69 = arith.mulf %68, %arg22 : vector<8x32xf32>
      %70 = arith.addf %67, %69 : vector<8x32xf32>
      %71 = vector.broadcast %9 : vector<1x32xf32> to vector<8x32xf32>
      %72 = arith.mulf %71, %arg23 : vector<8x32xf32>
      %73 = arith.addf %70, %72 : vector<8x32xf32>
      %74 = vector.broadcast %10 : vector<1x32xf32> to vector<8x32xf32>
      %75 = arith.mulf %74, %arg24 : vector<8x32xf32>
      %76 = arith.addf %73, %75 : vector<8x32xf32>
      %77 = arith.mulf %62, %65 : vector<8x32xf32>
      %78 = arith.mulf %63, %arg24 : vector<8x32xf32>
      %79 = arith.addf %77, %78 : vector<8x32xf32>
      %80 = arith.subf %79, %76 : vector<8x32xf32>
      %81 = math.tanh %80 : vector<8x32xf32>
      %82 = arith.mulf %64, %81 : vector<8x32xf32>
      %83 = tpu.concatenate %82, %arg18 in 1 : vector<8x32xf32>, vector<8x32xf32> -> vector<8x64xf32>
      %cst_56 = arith.constant dense<0.000000e+00> : vector<8x128xf32>
      %84 = tpu.matmul %83, %4, %cst_56 {dimension_numbers = #tpu.dot_dimension_numbers<[1], [0], [0], [1], [0, 0, 1, 1], [], []>} : vector<8x64xf32>, vector<64x128xf32>, vector<8x128xf32> -> vector<8x128xf32>
      %85 = vector.broadcast %5 : vector<1x128xf32> to vector<8x128xf32>
      %86 = arith.addf %84, %85 : vector<8x128xf32>
      %87 = arith.negf %86 : vector<8x128xf32>
      %88 = math.exp %87 : vector<8x128xf32>
      %cst_57 = arith.constant 1.000000e+00 : f32
      %89 = vector.broadcast %cst_57 : f32 to vector<8x128xf32>
      %90 = arith.addf %89, %88 : vector<8x128xf32>
      %91 = arith.divf %89, %90 : vector<8x128xf32>
      %92 = math.tanh %86 : vector<8x128xf32>
      %93 = vector.extract_strided_slice %91 {offsets = [0, 0], sizes = [8, 32], strides = [1, 1]} : vector<8x128xf32> to vector<8x32xf32>
      %94 = vector.extract_strided_slice %91 {offsets = [0, 32], sizes = [8, 32], strides = [1, 1]} : vector<8x128xf32> to vector<8x32xf32>
      %95 = vector.extract_strided_slice %91 {offsets = [0, 96], sizes = [8, 32], strides = [1, 1]} : vector<8x128xf32> to vector<8x32xf32>
      %96 = vector.extract_strided_slice %92 {offsets = [0, 64], sizes = [8, 32], strides = [1, 1]} : vector<8x128xf32> to vector<8x32xf32>
      %97 = arith.mulf %94, %arg19 : vector<8x32xf32>
      %98 = arith.mulf %93, %96 : vector<8x32xf32>
      %99 = arith.addf %97, %98 : vector<8x32xf32>
      %100 = math.tanh %99 : vector<8x32xf32>
      %101 = arith.mulf %95, %100 : vector<8x32xf32>
      %102 = math.tanh %101 : vector<8x32xf32>
      %103 = vector.broadcast %49 : i32 to vector<8x1xi32>
      %104 = arith.cmpi eq, %11, %103 : vector<8x1xi32>
      %105 = vector.shape_cast %104 : vector<8x1xi1> to vector<8x1xi1>
      %106 = vector.broadcast %105 : vector<8x1xi1> to vector<8x32xi1>
      %107 = arith.select %106, %102, %arg20 : vector<8x32xi1>, vector<8x32xf32>
      %108 = arith.addi %12, %47 : i32
      %c1_i32_58 = arith.constant 1 : i32
      %109 = arith.addi %108, %c1_i32_58 : i32
      %c1_i32_59 = arith.constant 1 : i32
      %110 = arith.addi %47, %c1_i32_59 : i32
      %111 = arith.index_cast %110 : i32 to index
      %c0_60 = arith.constant 0 : index
      %c0_61 = arith.constant 0 : index
      %112 = vector.load %arg2[%111, %c0_60, %c0_61] : memref<8x8x128xf32, #tpu.memory_space<vmem>>, vector<1x8x128xf32>
      %113 = vector.shape_cast %112 : vector<1x8x128xf32> to vector<8x128xf32>
      %cst_62 = arith.constant dense<0.000000e+00> : vector<8x128xf32>
      %114 = tpu.matmul %82, %3, %cst_62 {dimension_numbers = #tpu.dot_dimension_numbers<[1], [0], [0], [1], [0, 0, 1, 1], [], []>} : vector<8x32xf32>, vector<32x128xf32>, vector<8x128xf32> -> vector<8x128xf32>
      %115 = arith.addf %113, %114 : vector<8x128xf32>
      %116 = arith.negf %115 : vector<8x128xf32>
      %117 = math.exp %116 : vector<8x128xf32>
      %cst_63 = arith.constant 1.000000e+00 : f32
      %118 = vector.broadcast %cst_63 : f32 to vector<8x128xf32>
      %119 = arith.addf %118, %117 : vector<8x128xf32>
      %120 = arith.divf %118, %119 : vector<8x128xf32>
      %121 = math.tanh %115 : vector<8x128xf32>
      %122 = vector.extract_strided_slice %120 {offsets = [0, 0], sizes = [8, 32], strides = [1, 1]} : vector<8x128xf32> to vector<8x32xf32>
      %123 = vector.extract_strided_slice %120 {offsets = [0, 32], sizes = [8, 32], strides = [1, 1]} : vector<8x128xf32> to vector<8x32xf32>
      %124 = vector.extract_strided_slice %120 {offsets = [0, 96], sizes = [8, 32], strides = [1, 1]} : vector<8x128xf32> to vector<8x32xf32>
      %125 = vector.extract_strided_slice %121 {offsets = [0, 64], sizes = [8, 32], strides = [1, 1]} : vector<8x128xf32> to vector<8x32xf32>
      %126 = vector.broadcast %10 : vector<1x32xf32> to vector<8x32xf32>
      %127 = arith.mulf %126, %80 : vector<8x32xf32>
      %128 = vector.broadcast %7 : vector<1x32xf32> to vector<8x32xf32>
      %129 = arith.mulf %128, %arg22 : vector<8x32xf32>
      %130 = arith.addf %127, %129 : vector<8x32xf32>
      %131 = vector.broadcast %8 : vector<1x32xf32> to vector<8x32xf32>
      %132 = arith.mulf %131, %arg23 : vector<8x32xf32>
      %133 = arith.addf %130, %132 : vector<8x32xf32>
      %134 = vector.broadcast %9 : vector<1x32xf32> to vector<8x32xf32>
      %135 = arith.mulf %134, %arg24 : vector<8x32xf32>
      %136 = arith.addf %133, %135 : vector<8x32xf32>
      %137 = arith.mulf %122, %125 : vector<8x32xf32>
      %138 = arith.mulf %123, %80 : vector<8x32xf32>
      %139 = arith.addf %137, %138 : vector<8x32xf32>
      %140 = arith.subf %139, %136 : vector<8x32xf32>
      %141 = math.tanh %140 : vector<8x32xf32>
      %142 = arith.mulf %124, %141 : vector<8x32xf32>
      %143 = tpu.concatenate %142, %102 in 1 : vector<8x32xf32>, vector<8x32xf32> -> vector<8x64xf32>
      %cst_64 = arith.constant dense<0.000000e+00> : vector<8x128xf32>
      %144 = tpu.matmul %143, %4, %cst_64 {dimension_numbers = #tpu.dot_dimension_numbers<[1], [0], [0], [1], [0, 0, 1, 1], [], []>} : vector<8x64xf32>, vector<64x128xf32>, vector<8x128xf32> -> vector<8x128xf32>
      %145 = vector.broadcast %5 : vector<1x128xf32> to vector<8x128xf32>
      %146 = arith.addf %144, %145 : vector<8x128xf32>
      %147 = arith.negf %146 : vector<8x128xf32>
      %148 = math.exp %147 : vector<8x128xf32>
      %cst_65 = arith.constant 1.000000e+00 : f32
      %149 = vector.broadcast %cst_65 : f32 to vector<8x128xf32>
      %150 = arith.addf %149, %148 : vector<8x128xf32>
      %151 = arith.divf %149, %150 : vector<8x128xf32>
      %152 = math.tanh %146 : vector<8x128xf32>
      %153 = vector.extract_strided_slice %151 {offsets = [0, 0], sizes = [8, 32], strides = [1, 1]} : vector<8x128xf32> to vector<8x32xf32>
      %154 = vector.extract_strided_slice %151 {offsets = [0, 32], sizes = [8, 32], strides = [1, 1]} : vector<8x128xf32> to vector<8x32xf32>
      %155 = vector.extract_strided_slice %151 {offsets = [0, 96], sizes = [8, 32], strides = [1, 1]} : vector<8x128xf32> to vector<8x32xf32>
      %156 = vector.extract_strided_slice %152 {offsets = [0, 64], sizes = [8, 32], strides = [1, 1]} : vector<8x128xf32> to vector<8x32xf32>
      %157 = arith.mulf %154, %99 : vector<8x32xf32>
      %158 = arith.mulf %153, %156 : vector<8x32xf32>
      %159 = arith.addf %157, %158 : vector<8x32xf32>
      %160 = math.tanh %159 : vector<8x32xf32>
      %161 = arith.mulf %155, %160 : vector<8x32xf32>
      %162 = math.tanh %161 : vector<8x32xf32>
      %163 = vector.broadcast %109 : i32 to vector<8x1xi32>
      %164 = arith.cmpi eq, %11, %163 : vector<8x1xi32>
      %165 = vector.shape_cast %164 : vector<8x1xi1> to vector<8x1xi1>
      %166 = vector.broadcast %165 : vector<8x1xi1> to vector<8x32xi1>
      %167 = arith.select %166, %162, %107 : vector<8x32xi1>, vector<8x32xf32>
      %168 = arith.addi %12, %47 : i32
      %c2_i32_66 = arith.constant 2 : i32
      %169 = arith.addi %168, %c2_i32_66 : i32
      %c2_i32_67 = arith.constant 2 : i32
      %170 = arith.addi %47, %c2_i32_67 : i32
      %171 = arith.index_cast %170 : i32 to index
      %c0_68 = arith.constant 0 : index
      %c0_69 = arith.constant 0 : index
      %172 = vector.load %arg2[%171, %c0_68, %c0_69] : memref<8x8x128xf32, #tpu.memory_space<vmem>>, vector<1x8x128xf32>
      %173 = vector.shape_cast %172 : vector<1x8x128xf32> to vector<8x128xf32>
      %cst_70 = arith.constant dense<0.000000e+00> : vector<8x128xf32>
      %174 = tpu.matmul %142, %3, %cst_70 {dimension_numbers = #tpu.dot_dimension_numbers<[1], [0], [0], [1], [0, 0, 1, 1], [], []>} : vector<8x32xf32>, vector<32x128xf32>, vector<8x128xf32> -> vector<8x128xf32>
      %175 = arith.addf %173, %174 : vector<8x128xf32>
      %176 = arith.negf %175 : vector<8x128xf32>
      %177 = math.exp %176 : vector<8x128xf32>
      %cst_71 = arith.constant 1.000000e+00 : f32
      %178 = vector.broadcast %cst_71 : f32 to vector<8x128xf32>
      %179 = arith.addf %178, %177 : vector<8x128xf32>
      %180 = arith.divf %178, %179 : vector<8x128xf32>
      %181 = math.tanh %175 : vector<8x128xf32>
      %182 = vector.extract_strided_slice %180 {offsets = [0, 0], sizes = [8, 32], strides = [1, 1]} : vector<8x128xf32> to vector<8x32xf32>
      %183 = vector.extract_strided_slice %180 {offsets = [0, 32], sizes = [8, 32], strides = [1, 1]} : vector<8x128xf32> to vector<8x32xf32>
      %184 = vector.extract_strided_slice %180 {offsets = [0, 96], sizes = [8, 32], strides = [1, 1]} : vector<8x128xf32> to vector<8x32xf32>
      %185 = vector.extract_strided_slice %181 {offsets = [0, 64], sizes = [8, 32], strides = [1, 1]} : vector<8x128xf32> to vector<8x32xf32>
      %186 = vector.broadcast %9 : vector<1x32xf32> to vector<8x32xf32>
      %187 = arith.mulf %186, %80 : vector<8x32xf32>
      %188 = vector.broadcast %10 : vector<1x32xf32> to vector<8x32xf32>
      %189 = arith.mulf %188, %140 : vector<8x32xf32>
      %190 = arith.addf %187, %189 : vector<8x32xf32>
      %191 = vector.broadcast %7 : vector<1x32xf32> to vector<8x32xf32>
      %192 = arith.mulf %191, %arg23 : vector<8x32xf32>
      %193 = arith.addf %190, %192 : vector<8x32xf32>
      %194 = vector.broadcast %8 : vector<1x32xf32> to vector<8x32xf32>
      %195 = arith.mulf %194, %arg24 : vector<8x32xf32>
      %196 = arith.addf %193, %195 : vector<8x32xf32>
      %197 = arith.mulf %182, %185 : vector<8x32xf32>
      %198 = arith.mulf %183, %140 : vector<8x32xf32>
      %199 = arith.addf %197, %198 : vector<8x32xf32>
      %200 = arith.subf %199, %196 : vector<8x32xf32>
      %201 = math.tanh %200 : vector<8x32xf32>
      %202 = arith.mulf %184, %201 : vector<8x32xf32>
      %203 = tpu.concatenate %202, %162 in 1 : vector<8x32xf32>, vector<8x32xf32> -> vector<8x64xf32>
      %cst_72 = arith.constant dense<0.000000e+00> : vector<8x128xf32>
      %204 = tpu.matmul %203, %4, %cst_72 {dimension_numbers = #tpu.dot_dimension_numbers<[1], [0], [0], [1], [0, 0, 1, 1], [], []>} : vector<8x64xf32>, vector<64x128xf32>, vector<8x128xf32> -> vector<8x128xf32>
      %205 = vector.broadcast %5 : vector<1x128xf32> to vector<8x128xf32>
      %206 = arith.addf %204, %205 : vector<8x128xf32>
      %207 = arith.negf %206 : vector<8x128xf32>
      %208 = math.exp %207 : vector<8x128xf32>
      %cst_73 = arith.constant 1.000000e+00 : f32
      %209 = vector.broadcast %cst_73 : f32 to vector<8x128xf32>
      %210 = arith.addf %209, %208 : vector<8x128xf32>
      %211 = arith.divf %209, %210 : vector<8x128xf32>
      %212 = math.tanh %206 : vector<8x128xf32>
      %213 = vector.extract_strided_slice %211 {offsets = [0, 0], sizes = [8, 32], strides = [1, 1]} : vector<8x128xf32> to vector<8x32xf32>
      %214 = vector.extract_strided_slice %211 {offsets = [0, 32], sizes = [8, 32], strides = [1, 1]} : vector<8x128xf32> to vector<8x32xf32>
      %215 = vector.extract_strided_slice %211 {offsets = [0, 96], sizes = [8, 32], strides = [1, 1]} : vector<8x128xf32> to vector<8x32xf32>
      %216 = vector.extract_strided_slice %212 {offsets = [0, 64], sizes = [8, 32], strides = [1, 1]} : vector<8x128xf32> to vector<8x32xf32>
      %217 = arith.mulf %214, %159 : vector<8x32xf32>
      %218 = arith.mulf %213, %216 : vector<8x32xf32>
      %219 = arith.addf %217, %218 : vector<8x32xf32>
      %220 = math.tanh %219 : vector<8x32xf32>
      %221 = arith.mulf %215, %220 : vector<8x32xf32>
      %222 = math.tanh %221 : vector<8x32xf32>
      %223 = vector.broadcast %169 : i32 to vector<8x1xi32>
      %224 = arith.cmpi eq, %11, %223 : vector<8x1xi32>
      %225 = vector.shape_cast %224 : vector<8x1xi1> to vector<8x1xi1>
      %226 = vector.broadcast %225 : vector<8x1xi1> to vector<8x32xi1>
      %227 = arith.select %226, %222, %167 : vector<8x32xi1>, vector<8x32xf32>
      %228 = arith.addi %12, %47 : i32
      %c3_i32 = arith.constant 3 : i32
      %229 = arith.addi %228, %c3_i32 : i32
      %c3_i32_74 = arith.constant 3 : i32
      %230 = arith.addi %47, %c3_i32_74 : i32
      %231 = arith.index_cast %230 : i32 to index
      %c0_75 = arith.constant 0 : index
      %c0_76 = arith.constant 0 : index
      %232 = vector.load %arg2[%231, %c0_75, %c0_76] : memref<8x8x128xf32, #tpu.memory_space<vmem>>, vector<1x8x128xf32>
      %233 = vector.shape_cast %232 : vector<1x8x128xf32> to vector<8x128xf32>
      %cst_77 = arith.constant dense<0.000000e+00> : vector<8x128xf32>
      %234 = tpu.matmul %202, %3, %cst_77 {dimension_numbers = #tpu.dot_dimension_numbers<[1], [0], [0], [1], [0, 0, 1, 1], [], []>} : vector<8x32xf32>, vector<32x128xf32>, vector<8x128xf32> -> vector<8x128xf32>
      %235 = arith.addf %233, %234 : vector<8x128xf32>
      %236 = arith.negf %235 : vector<8x128xf32>
      %237 = math.exp %236 : vector<8x128xf32>
      %cst_78 = arith.constant 1.000000e+00 : f32
      %238 = vector.broadcast %cst_78 : f32 to vector<8x128xf32>
      %239 = arith.addf %238, %237 : vector<8x128xf32>
      %240 = arith.divf %238, %239 : vector<8x128xf32>
      %241 = math.tanh %235 : vector<8x128xf32>
      %242 = vector.extract_strided_slice %240 {offsets = [0, 0], sizes = [8, 32], strides = [1, 1]} : vector<8x128xf32> to vector<8x32xf32>
      %243 = vector.extract_strided_slice %240 {offsets = [0, 32], sizes = [8, 32], strides = [1, 1]} : vector<8x128xf32> to vector<8x32xf32>
      %244 = vector.extract_strided_slice %240 {offsets = [0, 96], sizes = [8, 32], strides = [1, 1]} : vector<8x128xf32> to vector<8x32xf32>
      %245 = vector.extract_strided_slice %241 {offsets = [0, 64], sizes = [8, 32], strides = [1, 1]} : vector<8x128xf32> to vector<8x32xf32>
      %246 = vector.broadcast %8 : vector<1x32xf32> to vector<8x32xf32>
      %247 = arith.mulf %246, %80 : vector<8x32xf32>
      %248 = vector.broadcast %9 : vector<1x32xf32> to vector<8x32xf32>
      %249 = arith.mulf %248, %140 : vector<8x32xf32>
      %250 = arith.addf %247, %249 : vector<8x32xf32>
      %251 = vector.broadcast %10 : vector<1x32xf32> to vector<8x32xf32>
      %252 = arith.mulf %251, %200 : vector<8x32xf32>
      %253 = arith.addf %250, %252 : vector<8x32xf32>
      %254 = vector.broadcast %7 : vector<1x32xf32> to vector<8x32xf32>
      %255 = arith.mulf %254, %arg24 : vector<8x32xf32>
      %256 = arith.addf %253, %255 : vector<8x32xf32>
      %257 = arith.mulf %242, %245 : vector<8x32xf32>
      %258 = arith.mulf %243, %200 : vector<8x32xf32>
      %259 = arith.addf %257, %258 : vector<8x32xf32>
      %260 = arith.subf %259, %256 : vector<8x32xf32>
      %261 = math.tanh %260 : vector<8x32xf32>
      %262 = arith.mulf %244, %261 : vector<8x32xf32>
      %263 = tpu.concatenate %262, %222 in 1 : vector<8x32xf32>, vector<8x32xf32> -> vector<8x64xf32>
      %cst_79 = arith.constant dense<0.000000e+00> : vector<8x128xf32>
      %264 = tpu.matmul %263, %4, %cst_79 {dimension_numbers = #tpu.dot_dimension_numbers<[1], [0], [0], [1], [0, 0, 1, 1], [], []>} : vector<8x64xf32>, vector<64x128xf32>, vector<8x128xf32> -> vector<8x128xf32>
      %265 = vector.broadcast %5 : vector<1x128xf32> to vector<8x128xf32>
      %266 = arith.addf %264, %265 : vector<8x128xf32>
      %267 = arith.negf %266 : vector<8x128xf32>
      %268 = math.exp %267 : vector<8x128xf32>
      %cst_80 = arith.constant 1.000000e+00 : f32
      %269 = vector.broadcast %cst_80 : f32 to vector<8x128xf32>
      %270 = arith.addf %269, %268 : vector<8x128xf32>
      %271 = arith.divf %269, %270 : vector<8x128xf32>
      %272 = math.tanh %266 : vector<8x128xf32>
      %273 = vector.extract_strided_slice %271 {offsets = [0, 0], sizes = [8, 32], strides = [1, 1]} : vector<8x128xf32> to vector<8x32xf32>
      %274 = vector.extract_strided_slice %271 {offsets = [0, 32], sizes = [8, 32], strides = [1, 1]} : vector<8x128xf32> to vector<8x32xf32>
      %275 = vector.extract_strided_slice %271 {offsets = [0, 96], sizes = [8, 32], strides = [1, 1]} : vector<8x128xf32> to vector<8x32xf32>
      %276 = vector.extract_strided_slice %272 {offsets = [0, 64], sizes = [8, 32], strides = [1, 1]} : vector<8x128xf32> to vector<8x32xf32>
      %277 = arith.mulf %274, %219 : vector<8x32xf32>
      %278 = arith.mulf %273, %276 : vector<8x32xf32>
      %279 = arith.addf %277, %278 : vector<8x32xf32>
      %280 = math.tanh %279 : vector<8x32xf32>
      %281 = arith.mulf %275, %280 : vector<8x32xf32>
      %282 = math.tanh %281 : vector<8x32xf32>
      %283 = vector.broadcast %229 : i32 to vector<8x1xi32>
      %284 = arith.cmpi eq, %11, %283 : vector<8x1xi32>
      %285 = vector.shape_cast %284 : vector<8x1xi1> to vector<8x1xi1>
      %286 = vector.broadcast %285 : vector<8x1xi1> to vector<8x32xi1>
      %287 = arith.select %286, %282, %227 : vector<8x32xi1>, vector<8x32xf32>
      scf.yield %262, %282, %279, %287, %80, %140, %200, %260 : vector<8x32xf32>, vector<8x32xf32>, vector<8x32xf32>, vector<8x32xf32>, vector<8x32xf32>, vector<8x32xf32>, vector<8x32xf32>, vector<8x32xf32>
    }
    %c2_i32_28 = arith.constant 2 : i32
    %c0_29 = arith.constant 0 : index
    %c0_30 = arith.constant 0 : index
    %27 = vector.load %arg11[%c0_29, %c0_30] : memref<8x32xf32, #tpu.memory_space<vmem>>, vector<8x32xf32>
    tpu.vector_store %arg11[%c0_29, %c0_30], %26#0 {strides = array<i32>} : memref<8x32xf32, #tpu.memory_space<vmem>>, vector<8x32xf32>,
    %c0_31 = arith.constant 0 : index
    %c0_32 = arith.constant 0 : index
    %28 = vector.load %arg13[%c0_31, %c0_32] : memref<8x32xf32, #tpu.memory_space<vmem>>, vector<8x32xf32>
    tpu.vector_store %arg13[%c0_31, %c0_32], %26#1 {strides = array<i32>} : memref<8x32xf32, #tpu.memory_space<vmem>>, vector<8x32xf32>,
    %c0_33 = arith.constant 0 : index
    %c0_34 = arith.constant 0 : index
    %29 = vector.load %arg14[%c0_33, %c0_34] : memref<8x32xf32, #tpu.memory_space<vmem>>, vector<8x32xf32>
    tpu.vector_store %arg14[%c0_33, %c0_34], %26#2 {strides = array<i32>} : memref<8x32xf32, #tpu.memory_space<vmem>>, vector<8x32xf32>,
    %c0_35 = arith.constant 0 : index
    %c0_36 = arith.constant 0 : index
    %30 = vector.load %arg15[%c0_35, %c0_36] : memref<8x32xf32, #tpu.memory_space<vmem>>, vector<8x32xf32>
    tpu.vector_store %arg15[%c0_35, %c0_36], %26#3 {strides = array<i32>} : memref<8x32xf32, #tpu.memory_space<vmem>>, vector<8x32xf32>,
    %c0_37 = arith.constant 0 : index
    %c0_38 = arith.constant 0 : index
    %c0_39 = arith.constant 0 : index
    %31 = vector.load %arg12[%c0_37, %c0_38, %c0_39] : memref<4x8x32xf32, #tpu.memory_space<vmem>>, vector<1x8x32xf32>
    %32 = vector.shape_cast %31 : vector<1x8x32xf32> to vector<8x32xf32>
    %33 = vector.shape_cast %26#4 : vector<8x32xf32> to vector<1x8x32xf32>
    tpu.vector_store %arg12[%c0_37, %c0_38, %c0_39], %33 {strides = array<i32>} : memref<4x8x32xf32, #tpu.memory_space<vmem>>, vector<1x8x32xf32>,
    %c1_40 = arith.constant 1 : index
    %c0_41 = arith.constant 0 : index
    %c0_42 = arith.constant 0 : index
    %34 = vector.load %arg12[%c1_40, %c0_41, %c0_42] : memref<4x8x32xf32, #tpu.memory_space<vmem>>, vector<1x8x32xf32>
    %35 = vector.shape_cast %34 : vector<1x8x32xf32> to vector<8x32xf32>
    %36 = vector.shape_cast %26#5 : vector<8x32xf32> to vector<1x8x32xf32>
    tpu.vector_store %arg12[%c1_40, %c0_41, %c0_42], %36 {strides = array<i32>} : memref<4x8x32xf32, #tpu.memory_space<vmem>>, vector<1x8x32xf32>,
    %c2_43 = arith.constant 2 : index
    %c0_44 = arith.constant 0 : index
    %c0_45 = arith.constant 0 : index
    %37 = vector.load %arg12[%c2_43, %c0_44, %c0_45] : memref<4x8x32xf32, #tpu.memory_space<vmem>>, vector<1x8x32xf32>
    %38 = vector.shape_cast %37 : vector<1x8x32xf32> to vector<8x32xf32>
    %39 = vector.shape_cast %26#6 : vector<8x32xf32> to vector<1x8x32xf32>
    tpu.vector_store %arg12[%c2_43, %c0_44, %c0_45], %39 {strides = array<i32>} : memref<4x8x32xf32, #tpu.memory_space<vmem>>, vector<1x8x32xf32>,
    %c3_46 = arith.constant 3 : index
    %c0_47 = arith.constant 0 : index
    %c0_48 = arith.constant 0 : index
    %40 = vector.load %arg12[%c3_46, %c0_47, %c0_48] : memref<4x8x32xf32, #tpu.memory_space<vmem>>, vector<1x8x32xf32>
    %41 = vector.shape_cast %40 : vector<1x8x32xf32> to vector<8x32xf32>
    %42 = vector.shape_cast %26#7 : vector<8x32xf32> to vector<1x8x32xf32>
    tpu.vector_store %arg12[%c3_46, %c0_47, %c0_48], %42 {strides = array<i32>} : memref<4x8x32xf32, #tpu.memory_space<vmem>>, vector<1x8x32xf32>,
    %c0_i32_49 = arith.constant 0 : i32
    %43 = arith.cmpi eq, %arg1, %c0_i32_49 : i32
    %44 = arith.extui %43 : i1 to i32
    %c0_i32_50 = arith.constant 0 : i32
    %45 = arith.cmpi ne, %44, %c0_i32_50 : i32
    scf.if %45 {
      %c0_51 = arith.constant 0 : index
      %c0_52 = arith.constant 0 : index
      %46 = vector.load %arg8[%c0_51, %c0_52] : memref<32x5xf32, #tpu.memory_space<vmem>>, vector<32x5xf32>
      %cst = arith.constant dense<0.000000e+00> : vector<8x5xf32>
      %47 = tpu.matmul %26#3, %46, %cst {dimension_numbers = #tpu.dot_dimension_numbers<[1], [0], [0], [1], [0, 0, 1, 1], [], []>} : vector<8x32xf32>, vector<32x5xf32>, vector<8x5xf32> -> vector<8x5xf32>
      %c0_53 = arith.constant 0 : index
      %c0_54 = arith.constant 0 : index
      %48 = vector.load %arg9[%c0_53, %c0_54] : memref<1x5xf32, #tpu.memory_space<vmem>>, vector<1x5xf32>
      %49 = vector.broadcast %48 : vector<1x5xf32> to vector<8x5xf32>
      %50 = arith.addf %47, %49 : vector<8x5xf32>
      %cst_55 = arith.constant dense<0xFF800000> : vector<8xf32>
      %51 = vector.multi_reduction <maximumf>, %50, %cst_55 [1] : vector<8x5xf32> to vector<8xf32>
      %52 = vector.shape_cast %51 : vector<8xf32> to vector<8x1xf32>
      %53 = vector.broadcast %52 : vector<8x1xf32> to vector<8x5xf32>
      %54 = arith.subf %50, %53 : vector<8x5xf32>
      %55 = math.exp %54 : vector<8x5xf32>
      %cst_56 = arith.constant dense<0.000000e+00> : vector<8xf32>
      %56 = vector.multi_reduction <add>, %55, %cst_56 [1] : vector<8x5xf32> to vector<8xf32>
      %57 = vector.shape_cast %56 : vector<8xf32> to vector<8x1xf32>
      %58 = math.log %57 : vector<8x1xf32>
      %59 = arith.addf %58, %52 : vector<8x1xf32>
      %60 = vector.broadcast %59 : vector<8x1xf32> to vector<8x5xf32>
      %61 = arith.subf %50, %60 : vector<8x5xf32>
      %c0_57 = arith.constant 0 : index
      %c0_58 = arith.constant 0 : index
      %62 = vector.load %arg10[%c0_57, %c0_58] : memref<8x5xf32, #tpu.memory_space<vmem>>, vector<8x5xf32>
      tpu.vector_store %arg10[%c0_57, %c0_58], %61 {strides = array<i32>} : memref<8x5xf32, #tpu.memory_space<vmem>>, vector<8x5xf32>,
    } else {
    }
    return
  }
  func.func @transform_0(%arg0: i32, %arg1: i32) -> (i32, i32, i32) {
    %c0_i32 = arith.constant 0 : i32
    %c0_i32_0 = arith.constant 0 : i32
    return %arg1, %arg0, %c0_i32 : i32, i32, i32
  }
  func.func @transform_1(%arg0: i32, %arg1: i32) -> (i32, i32) {
    %c0_i32 = arith.constant 0 : i32
    %c0_i32_0 = arith.constant 0 : i32
    return %arg0, %c0_i32 : i32, i32
  }
  func.func @transform_2(%arg0: i32, %arg1: i32) -> (i32, i32) {
    %c0_i32 = arith.constant 0 : i32
    %c0_i32_0 = arith.constant 0 : i32
    %c0_i32_1 = arith.constant 0 : i32
    return %c0_i32, %c0_i32_0 : i32, i32
  }
  func.func @transform_3(%arg0: i32, %arg1: i32) -> (i32, i32) {
    %c0_i32 = arith.constant 0 : i32
    %c0_i32_0 = arith.constant 0 : i32
    %c0_i32_1 = arith.constant 0 : i32
    return %c0_i32, %c0_i32_0 : i32, i32
  }
  func.func @transform_4(%arg0: i32, %arg1: i32) -> (i32, i32) {
    %c0_i32 = arith.constant 0 : i32
    %c0_i32_0 = arith.constant 0 : i32
    %c0_i32_1 = arith.constant 0 : i32
    return %c0_i32, %c0_i32_0 : i32, i32
  }
  func.func @transform_5(%arg0: i32, %arg1: i32) -> (i32, i32) {
    %c0_i32 = arith.constant 0 : i32
    %c0_i32_0 = arith.constant 0 : i32
    %c0_i32_1 = arith.constant 0 : i32
    return %c0_i32, %c0_i32_0 : i32, i32
  }
  func.func @transform_6(%arg0: i32, %arg1: i32) -> (i32, i32) {
    %c0_i32 = arith.constant 0 : i32
    %c0_i32_0 = arith.constant 0 : i32
    %c0_i32_1 = arith.constant 0 : i32
    return %c0_i32, %c0_i32_0 : i32, i32
  }
  func.func @transform_7(%arg0: i32, %arg1: i32) -> (i32, i32) {
    %c0_i32 = arith.constant 0 : i32
    %c0_i32_0 = arith.constant 0 : i32
    %c0_i32_1 = arith.constant 0 : i32
    return %c0_i32, %c0_i32_0 : i32, i32
  }
  func.func @transform_8(%arg0: i32, %arg1: i32) -> (i32, i32) {
    %c0_i32 = arith.constant 0 : i32
    %c0_i32_0 = arith.constant 0 : i32
    return %arg0, %c0_i32 : i32, i32
  }
}

</mosaic_0001>

<llo_original>
// kernel: tpu_custom_call.1
$region0: #{tpu_custom_call.1}
  #allocation0 [shape = 'u32[]', space=smem, size = 0x4, offset = 0x4, fixed_abs, tag = 'smem constant byte address 0x4 - core index']
  #allocation1 [shape = 'u32[144,128]{1,0:T(1,128)}', space=vmem, size = 0x12000, scoped, tag = 'internal scratch']
  #allocation2 [shape = 'f32[8,32]{1,0:T(8,128)}', space=vmem, size = 0x1000, scoped, tag = 'scratch operand']
  #allocation3 [shape = 'f32[4,8,32]{2,1,0:T(8,128)}', space=vmem, size = 0x4000, scoped, tag = 'scratch operand']
  #allocation4 [shape = 'f32[8,32]{1,0:T(8,128)}', space=vmem, size = 0x1000, scoped, tag = 'scratch operand']
  #allocation5 [shape = 'f32[8,32]{1,0:T(8,128)}', space=vmem, size = 0x1000, scoped, tag = 'scratch operand']
  #allocation6 [shape = 'f32[8,32]{1,0:T(8,128)}', space=vmem, size = 0x1000, scoped, tag = 'scratch operand']
  %s0 = inlined_call_operand.hbm [shape: f32[8,8,128], index: 0, kind: input, shape index: {}]
  %s1 = inlined_call_operand.vmem [shape: s32[8,1], index: 1, kind: input, shape index: {}]
  %s2 = inlined_call_operand.hbm [shape: f32[4,32], index: 2, kind: input, shape index: {}]
  %s3 = inlined_call_operand.hbm [shape: f32[32,128], index: 3, kind: input, shape index: {}]
  %s4 = inlined_call_operand.vmem [shape: f32[64,128], index: 4, kind: input, shape index: {}]
  %s5 = inlined_call_operand.vmem [shape: f32[1,128], index: 5, kind: input, shape index: {}]
  %s6 = inlined_call_operand.vmem [shape: f32[32,5], index: 6, kind: input, shape index: {}]
  %s7 = inlined_call_operand.vmem [shape: f32[1,5], index: 7, kind: input, shape index: {}]
  %s8 = inlined_call_operand.hbm [shape: f32[8,5], index: 8, kind: output, shape index: {}]
  %s9 = sld [smem:[#allocation0]]
  $region69: #{tpu_custom_call.1} parent=0
    _
  %s11 = ssub.s32 1, %s9
  %s12 = scalar_select 0, %s11, %s9
  $region1: #{tpu_custom_call.1} parent=0
    #allocation7 [shape = 'u8[32768]{0}', space=vmem, size = 0x8000, scoped, tag = 'input window, operand 0, single buffered']
    #allocation8 [shape = 's32[1]{0}', space=sflag, size = 0x4, scoped, tag = 'scoped memory for tpu_custom_call.1']
    #allocation9 [shape = 's32[1]{0}', space=sflag, size = 0x4, scoped, tag = 'scoped memory for tpu_custom_call.1']
    #allocation10 [shape = 'u8[2048]{0}', space=vmem, size = 0x800, scoped, tag = 'input window, operand 2, single buffered']
    #allocation11 [shape = 's32[1]{0}', space=sflag, size = 0x4, scoped, tag = 'scoped memory for tpu_custom_call.1']
    #allocation12 [shape = 'u8[16384]{0}', space=vmem, size = 0x4000, scoped, tag = 'input window, operand 3, single buffered']
    #allocation13 [shape = 'u8[4096]{0}', space=vmem, size = 0x1000, scoped, tag = 'output window, operand 0, single buffered']
    %13 = vsyncpa [#allocation8], 0
    %14 = vsyncpa [#allocation11], 0
    %15 = vsyncpa [#allocation9], 0
    // Predicated region
    $region2: #{tpu_custom_call.1} parent=1 // pred_check
      _
    $region3: #{tpu_custom_call.1} parent=1 // pred_check_branch
      %17 = sbr.rel (0) target = $region5
    $region4: #{tpu_custom_call.1} parent=1 // pred_region
      %s19 = ssub.s32 1024, 1024
      %20 = vsyncadd [#allocation8], %s19
      %s21 = sshll.u32 [#allocation7], 4
      %s22 = int_to_ptr.vmem [resolvable:$true] %s21
      %27 = dma.hbm_to_vmem [thread:$0]  %s0, 1024, %s22, [#allocation8], 128, 128, 8
    $region5: #{tpu_custom_call.1} parent=1 // pred_fallthru
      _
    // Predicated region
    $region6: #{tpu_custom_call.1} parent=1 // pred_check
      _
    $region7: #{tpu_custom_call.1} parent=1 // pred_check_branch
      %29 = sbr.rel (0) target = $region9
    $region8: #{tpu_custom_call.1} parent=1 // pred_region
      _
    $region9: #{tpu_custom_call.1} parent=1 // pred_fallthru
      _
    // Predicated region
    $region10: #{tpu_custom_call.1} parent=1 // pred_check
      _
    $region11: #{tpu_custom_call.1} parent=1 // pred_check_branch
      %31 = sbr.rel (0) target = $region13
    $region12: #{tpu_custom_call.1} parent=1 // pred_region
      %s33 = ssub.s32 64, 64
      %34 = vsyncadd [#allocation11], %s33
      %s36 = sshll.u32 [#allocation10], 4
      %s37 = int_to_ptr.vmem [resolvable:$true] %s36
      %39 = dma.hbm_to_vmem [thread:$0]  %s2, 64, %s37, [#allocation11]
    $region13: #{tpu_custom_call.1} parent=1 // pred_fallthru
      _
    // Predicated region
    $region14: #{tpu_custom_call.1} parent=1 // pred_check
      _
    $region15: #{tpu_custom_call.1} parent=1 // pred_check_branch
      %41 = sbr.rel (0) target = $region17
    $region16: #{tpu_custom_call.1} parent=1 // pred_region
      %s43 = ssub.s32 512, 512
      %44 = vsyncadd [#allocation11], %s43
      %s45 = sshll.u32 [#allocation12], 4
      %s46 = int_to_ptr.vmem [resolvable:$true] %s45
      %51 = dma.hbm_to_vmem [thread:$0]  %s3, 512, %s46, [#allocation11], 128, 128, 8
    $region17: #{tpu_custom_call.1} parent=1 // pred_fallthru
      _
    // Predicated region
    $region18: #{tpu_custom_call.1} parent=1 // pred_check
      _
    $region19: #{tpu_custom_call.1} parent=1 // pred_check_branch
      %53 = sbr.rel (0) target = $region21
    $region20: #{tpu_custom_call.1} parent=1 // pred_region
      _
    $region21: #{tpu_custom_call.1} parent=1 // pred_fallthru
      _
    // Predicated region
    $region22: #{tpu_custom_call.1} parent=1 // pred_check
      _
    $region23: #{tpu_custom_call.1} parent=1 // pred_check_branch
      %55 = sbr.rel (0) target = $region25
    $region24: #{tpu_custom_call.1} parent=1 // pred_region
      _
    $region25: #{tpu_custom_call.1} parent=1 // pred_fallthru
      _
    // Predicated region
    $region26: #{tpu_custom_call.1} parent=1 // pred_check
      _
    $region27: #{tpu_custom_call.1} parent=1 // pred_check_branch
      %57 = sbr.rel (0) target = $region29
    $region28: #{tpu_custom_call.1} parent=1 // pred_region
      _
    $region29: #{tpu_custom_call.1} parent=1 // pred_fallthru
      _
    // Predicated region
    $region30: #{tpu_custom_call.1} parent=1 // pred_check
      _
    $region31: #{tpu_custom_call.1} parent=1 // pred_check_branch
      %59 = sbr.rel (0) target = $region33
    $region32: #{tpu_custom_call.1} parent=1 // pred_region
      _
    $region33: #{tpu_custom_call.1} parent=1 // pred_fallthru
      _
    // Predicated region
    $region34: #{tpu_custom_call.1} parent=1 // pred_check
      _
    $region35: #{tpu_custom_call.1} parent=1 // pred_check_branch
      %61 = sbr.rel (0) target = $region37
    $region36: #{tpu_custom_call.1} parent=1 // pred_region
      %62 = dma.done [#allocation8], 1024
    $region37: #{tpu_custom_call.1} parent=1 // pred_fallthru
      _
    // Predicated region
    $region38: #{tpu_custom_call.1} parent=1 // pred_check
      _
    $region39: #{tpu_custom_call.1} parent=1 // pred_check_branch
      %64 = sbr.rel (0) target = $region41
    $region40: #{tpu_custom_call.1} parent=1 // pred_region
      %65 = dma.done [#allocation11], 64
    $region41: #{tpu_custom_call.1} parent=1 // pred_fallthru
      _
    // Predicated region
    $region42: #{tpu_custom_call.1} parent=1 // pred_check
      _
    $region43: #{tpu_custom_call.1} parent=1 // pred_check_branch
      %67 = sbr.rel (0) target = $region45
    $region44: #{tpu_custom_call.1} parent=1 // pred_region
      %68 = dma.done [#allocation11], 512
    $region45: #{tpu_custom_call.1} parent=1 // pred_fallthru
      _
    %p69 = scmp.eq.s32.totalorder 0, 0
    // Predicated region
    $region46: #{tpu_custom_call.1} parent=1 // pred_check
      %p70 = pneg %p69
    $region47: #{tpu_custom_call.1} parent=1 // pred_check_branch
      %72 = sbr.rel (%p70) target = $region49
    $region48: #{tpu_custom_call.1} parent=1 // pred_region
      %vm73 = vcmask 261120
      %74 = vst.msk [vmem:[#allocation2] sm:$0xff] %vm73, 0.0
      %75 = vst.msk [vmem:[#allocation3] sm:$0xff] %vm73, 0.0
      %76 = vst.msk [vmem:[#allocation3 + $0x8] sm:$0xff] %vm73, 0.0
      %77 = vst.msk [vmem:[#allocation3 + $0x10] sm:$0xff] %vm73, 0.0
      %78 = vst.msk [vmem:[#allocation3 + $0x18] sm:$0xff] %vm73, 0.0
      %79 = vst.msk [vmem:[#allocation4] sm:$0xff] %vm73, 0.0
      %80 = vst.msk [vmem:[#allocation5] sm:$0xff] %vm73, 0.0
      %81 = vst.msk [vmem:[#allocation6] sm:$0xff] %vm73, 0.0
    $region49: #{tpu_custom_call.1} parent=1 // pred_fallthru
      _
    %v82 = vld [vmem:[#allocation12] sm:$0xff]
    %v83 = vld [vmem:[#allocation12 + $0x8] sm:$0xff]
    %v84 = vld [vmem:[#allocation12 + $0x10] sm:$0xff]
    %v85 = vld [vmem:[#allocation12 + $0x18] sm:$0xff]
    %v86 = vld [vmem:[%s4] sm:$0xff]
    %v87 = vld [vmem:[%s4 + $0x8] sm:$0xff]
    %v88 = vld [vmem:[%s4 + $0x10] sm:$0xff]
    %v89 = vld [vmem:[%s4 + $0x18] sm:$0xff]
    %v90 = vld [vmem:[%s4 + $0x20] sm:$0xff]
    %v91 = vld [vmem:[%s4 + $0x28] sm:$0xff]
    %v92 = vld [vmem:[%s4 + $0x30] sm:$0xff]
    %v93 = vld [vmem:[%s4 + $0x38] sm:$0xff]
    %v94 = vld [vmem:[%s5] sm:$0x1]
    %v95 = vld [vmem:[#allocation10] sm:$0xf]
    %v96 = vld [vmem:[%s1] sm:$0xff]
    %s97 = smul.u32 0, 8
    %v98 = vld [vmem:[#allocation2] sm:$0xff]
    %v99 = vld [vmem:[#allocation4] sm:$0xff]
    %v100 = vld [vmem:[#allocation5] sm:$0xff]
    %v101 = vld [vmem:[#allocation6] sm:$0xff]
    %v102 = vld [vmem:[#allocation3] sm:$0xff]
    %s103 = scalar_lea.vmem [#allocation3], 8
    %v104 = vld [vmem:[%s103] sm:$0xff]
    %s105 = scalar_lea.vmem [#allocation3], 16
    %v106 = vld [vmem:[%s105] sm:$0xff]
    %s107 = scalar_lea.vmem [#allocation3], 24
    %v108 = vld [vmem:[%s107] sm:$0xff]
    loop: start=0, step=1, limit=2
    $region50: #{tpu_custom_call.1} parent=1 // loop_pre_header
      _
    $region51: #{tpu_custom_call.1} parent=1 // loop_header
      %s110 = sphi 0, %s114
      %p111 = scmp.ge.s32.totalorder %s110, 2
      %v115 = vphi %v98, %v959
      %v116 = vphi %v99, %v1074
      %v117 = vphi %v100, %v1078
      %v118 = vphi %v101, %v1082
      %v119 = vphi %v102, %v248
      %v120 = vphi %v104, %v492
      %v121 = vphi %v106, %v721
      %v122 = vphi %v108, %v950
    $region52: #{tpu_custom_call.1} parent=1 // loop_header_branch
      %113 = sbr.rel (%p111) target = $region56
    $region53: #{tpu_custom_call.1} parent=1 // loop_body
      %s123 = smul.u32 %s110, 4
      %s124 = sadd.s32 %s97, %s123
      %s125 = smul.u32 %s123, 8
      %s126 = scalar_lea.vmem [#allocation7], %s125
      %v127 = vld [vmem:[%s126] sm:$0xff]
      %vm128 = vcmask 261120
      %v130 = vsel %vm128, %v115, 0
      %132 = vmatprep.subr.mxu0 0.0
      %133 = vmatpush1.msra.mxu0 %v82
      %134 = vmatprep.subr.mxu0 0.0
      %135 = vmatpush1.msra.mxu0 %v83
      %136 = vmatprep.subr.mxu0 0.0
      %137 = vmatpush1.msra.mxu0 %v84
      %138 = vmatprep.subr.mxu0 0.0
      %139 = vmatpush1.msra.mxu0 %v85
      %140 = vmatprep.subr.mxu0 0.0
      %141 = vmatpush1.msra.mxu0 0.0
      %142 = vmatprep.subr.mxu0 0.0
      %143 = vmatpush1.msra.mxu0 0.0
      %144 = vmatprep.subr.mxu0 0.0
      %145 = vmatpush1.msra.mxu0 0.0
      %146 = vmatprep.subr.mxu0 0.0
      %147 = vmatpush1.msra.mxu0 0.0
      %148 = vmatprep.subr.mxu0 0.0
      %149 = vmatpush1.msra.mxu0 0.0
      %150 = vmatprep.subr.mxu0 0.0
      %151 = vmatpush1.msra.mxu0 0.0
      %152 = vmatprep.subr.mxu0 0.0
      %153 = vmatpush1.msra.mxu0 0.0
      %154 = vmatprep.subr.mxu0 0.0
      %155 = vmatpush1.msra.mxu0 0.0
      %156 = vmatprep.subr.mxu0 0.0
      %157 = vmatpush1.msra.mxu0 0.0
      %158 = vmatprep.subr.mxu0 0.0
      %159 = vmatpush1.msra.mxu0 0.0
      %160 = vmatprep.subr.mxu0 0.0
      %161 = vmatpush1.msra.mxu0 0.0
      %162 = vmatprep.subr.mxu0 0.0
      %163 = vmatpush1.msra.mxu0 0.0
      %164 = vmatprep.subr.mxu0 0.0
      %165 = vmatpush1.msra.mxu0 0.0
      %166 = vmatprep.subr.mxu0 0.0
      %167 = vmatpush1.msra.mxu0 0.0
      %168 = vmatprep.subr.mxu0 0.0
      %169 = vmatpush1.msra.mxu0 0.0
      %170 = vmatprep.subr.mxu0 0.0
      %171 = vmatpush1.msra.mxu0 0.0
      %172 = vmatprep.subr.mxu0 0.0
      %173 = vmatpush1.msra.mxu0 0.0
      %174 = vmatprep.subr.mxu0 0.0
      %175 = vmatpush1.msra.mxu0 0.0
      %176 = vmatprep.subr.mxu0 0.0
      %177 = vmatpush1.msra.mxu0 0.0
      %178 = vmatprep.subr.mxu0 0.0
      %179 = vmatpush1.msra.mxu0 0.0
      %180 = vmatprep.subr.mxu0 0.0
      %181 = vmatpush1.msra.mxu0 0.0
      %182 = vmatprep.subr.mxu0 0.0
      %183 = vmatpush1.msra.mxu0 0.0
      %184 = vmatprep.subr.mxu0 0.0
      %185 = vmatpush1.msra.mxu0 0.0
      %186 = vmatprep.subr.mxu0 0.0
      %187 = vmatpush1.msra.mxu0 0.0
      %188 = vmatprep.subr.mxu0 0.0
      %189 = vmatpush1.msra.mxu0 0.0
      %190 = vmatprep.subr.mxu0 0.0
      %191 = vmatpush1.msra.mxu0 0.0
      %192 = vmatprep.subr.mxu0 0.0
      %193 = vmatpush1.msra.mxu0 0.0
      %194 = vmatprep.subr.mxu0 0.0
      %195 = vmatpush1.msra.mxu0 0.0
      %196 = vmatprep.mubr.f32.mxu0 0.0
      %197 = vmatmul.mubr.f32.gmra.mrb[0].mxu0 %v130
      %v198 = vpop.f32.mrb[0].mxu0
      %v199 = vadd.f32 0.0, %v198
      %v200 = vpop.f32.mrb[0].mxu0
      %201 = vdwg.mxu0
      %v202 = vadd.f32 %v127, %v199
      %v203 = vxor.u32 %v202, 2147483648
      %v204 = vmul.f32 %v203, 1.442695
      %v205 = vpow.pop %v204
      %v206 = vadd.f32 %v205, 1.0
      %v207 = vrcp.pop %v206
      %v208 = vmul.f32 1.0, %v207
      %v209 = vtanh.pop %v202
      %v210 = vlaneseq
      %v211 = vshrl.u32 %v210, 7
      %v212 = vsub.s32 0, %v211
      %v213 = vrot.slane %v95, %v212
      %v214 = vmul.f32 %v213, %v119
      %v215 = vlaneseq
      %v216 = vshrl.u32 %v215, 7
      %v217 = vsub.s32 1, %v216
      %v218 = vrot.slane %v95, %v217
      %v219 = vmul.f32 %v218, %v120
      %v220 = vadd.f32 %v214, %v219
      %v221 = vlaneseq
      %v222 = vshrl.u32 %v221, 7
      %v223 = vsub.s32 2, %v222
      %v224 = vrot.slane %v95, %v223
      %v225 = vmul.f32 %v224, %v121
      %v226 = vadd.f32 %v220, %v225
      %v227 = vlaneseq
      %v228 = vshrl.u32 %v227, 7
      %v229 = vsub.s32 3, %v228
      %v230 = vrot.slane %v95, %v229
      %v231 = vmul.f32 %v230, %v122
      %v232 = vadd.f32 %v226, %v231
      %234 = vrot.lane.b32.xlu0 %v209, 64
      %v235 = vpop.permute.xlu0 %234
      %v237 = vmul.f32 %v208, %v235
      %239 = vrot.lane.b32.xlu0 %v122, 32
      %v240 = vpop.permute.xlu0 %239
      %v242 = vmul.f32 %v208, %v240
      %244 = vrot.lane.b32.xlu0 %v242, 96
      %v245 = vpop.permute.xlu0 %244
      %v247 = vadd.f32 %v237, %v245
      %v248 = vsub.f32 %v247, %v232
      %v249 = vtanh.pop %v248
      %251 = vrot.lane.b32.xlu0 %v249, 96
      %v252 = vpop.permute.xlu0 %251
      %v254 = vmul.f32 %v208, %v252
      %256 = vrot.lane.b32.xlu0 %v254, 32
      %v257 = vpop.permute.xlu0 %256
      %260 = vrot.lane.b32.xlu0 %v116, 32
      %v261 = vpop.permute.xlu0 %260
      %v263 = vsel %vm128, %v257, %v261
      %v265 = vlaneseq
      %v266 = vshrl.u32 %v265, 7
      %v267 = vsub.s32 0, %v266
      %v268 = vrot.slane %v94, %v267
      %vm270 = vcmask 523264
      %v272 = vsel %vm270, %v263, 0
      %274 = vmatprep.subr.mxu0 0.0
      %275 = vmatpush1.msra.mxu0 %v86
      %276 = vmatprep.subr.mxu0 0.0
      %277 = vmatpush1.msra.mxu0 %v87
      %278 = vmatprep.subr.mxu0 0.0
      %279 = vmatpush1.msra.mxu0 %v88
      %280 = vmatprep.subr.mxu0 0.0
      %281 = vmatpush1.msra.mxu0 %v89
      %282 = vmatprep.subr.mxu0 0.0
      %283 = vmatpush1.msra.mxu0 %v90
      %284 = vmatprep.subr.mxu0 0.0
      %285 = vmatpush1.msra.mxu0 %v91
      %286 = vmatprep.subr.mxu0 0.0
      %287 = vmatpush1.msra.mxu0 %v92
      %288 = vmatprep.subr.mxu0 0.0
      %289 = vmatpush1.msra.mxu0 %v93
      %290 = vmatprep.subr.mxu0 0.0
      %291 = vmatpush1.msra.mxu0 0.0
      %292 = vmatprep.subr.mxu0 0.0
      %293 = vmatpush1.msra.mxu0 0.0
      %294 = vmatprep.subr.mxu0 0.0
      %295 = vmatpush1.msra.mxu0 0.0
      %296 = vmatprep.subr.mxu0 0.0
      %297 = vmatpush1.msra.mxu0 0.0
      %298 = vmatprep.subr.mxu0 0.0
      %299 = vmatpush1.msra.mxu0 0.0
      %300 = vmatprep.subr.mxu0 0.0
      %301 = vmatpush1.msra.mxu0 0.0
      %302 = vmatprep.subr.mxu0 0.0
      %303 = vmatpush1.msra.mxu0 0.0
      %304 = vmatprep.subr.mxu0 0.0
      %305 = vmatpush1.msra.mxu0 0.0
      %306 = vmatprep.subr.mxu0 0.0
      %307 = vmatpush1.msra.mxu0 0.0
      %308 = vmatprep.subr.mxu0 0.0
      %309 = vmatpush1.msra.mxu0 0.0
      %310 = vmatprep.subr.mxu0 0.0
      %311 = vmatpush1.msra.mxu0 0.0
      %312 = vmatprep.subr.mxu0 0.0
      %313 = vmatpush1.msra.mxu0 0.0
      %314 = vmatprep.subr.mxu0 0.0
      %315 = vmatpush1.msra.mxu0 0.0
      %316 = vmatprep.subr.mxu0 0.0
      %317 = vmatpush1.msra.mxu0 0.0
      %318 = vmatprep.subr.mxu0 0.0
      %319 = vmatpush1.msra.mxu0 0.0
      %320 = vmatprep.subr.mxu0 0.0
      %321 = vmatpush1.msra.mxu0 0.0
      %322 = vmatprep.subr.mxu0 0.0
      %323 = vmatpush1.msra.mxu0 0.0
      %324 = vmatprep.subr.mxu0 0.0
      %325 = vmatpush1.msra.mxu0 0.0
      %326 = vmatprep.subr.mxu0 0.0
      %327 = vmatpush1.msra.mxu0 0.0
      %328 = vmatprep.subr.mxu0 0.0
      %329 = vmatpush1.msra.mxu0 0.0
      %330 = vmatprep.subr.mxu0 0.0
      %331 = vmatpush1.msra.mxu0 0.0
      %332 = vmatprep.subr.mxu0 0.0
      %333 = vmatpush1.msra.mxu0 0.0
      %334 = vmatprep.subr.mxu0 0.0
      %335 = vmatpush1.msra.mxu0 0.0
      %336 = vmatprep.subr.mxu0 0.0
      %337 = vmatpush1.msra.mxu0 0.0
      %338 = vmatprep.mubr.f32.mxu0 0.0
      %339 = vmatmul.mubr.f32.gmra.mrb[0].mxu0 %v272
      %v340 = vpop.f32.mrb[0].mxu0
      %v341 = vadd.f32 %v268, %v340
      %v342 = vpop.f32.mrb[0].mxu0
      %343 = vdwg.mxu0
      %v344 = vxor.u32 %v341, 2147483648
      %v345 = vmul.f32 %v344, 1.442695
      %v346 = vpow.pop %v345
      %v347 = vadd.f32 %v346, 1.0
      %v348 = vrcp.pop %v347
      %v349 = vmul.f32 1.0, %v348
      %v350 = vtanh.pop %v341
      %352 = vrot.lane.b32.xlu0 %v117, 32
      %v353 = vpop.permute.xlu0 %352
      %v355 = vmul.f32 %v349, %v353
      %357 = vrot.lane.b32.xlu0 %v350, 64
      %v358 = vpop.permute.xlu0 %357
      %v360 = vmul.f32 %v349, %v358
      %362 = vrot.lane.b32.xlu0 %v360, 32
      %v363 = vpop.permute.xlu0 %362
      %v365 = vadd.f32 %v355, %v363
      %v366 = vtanh.pop %v365
      %368 = vrot.lane.b32.xlu0 %v366, 64
      %v369 = vpop.permute.xlu0 %368
      %v371 = vmul.f32 %v349, %v369
      %v372 = vtanh.pop %v371
      %v373 = vstv %s124
      %vm374 = vcmp.eq.s32.totalorder %v96, %v373
      %v375 = vsel %vm374, 1, 0
      %376 = vset.pattern.permute.xlu0 0
      %377 = vperm.xlu0 %376, %v375
      %v378 = vpop.permute.xlu0 %377
      %vm379 = vcmp.eq.s32.totalorder %v378, 1
      %381 = vrot.lane.b32.xlu0 %v118, 96
      %v382 = vpop.permute.xlu0 %381
      %v384 = vsel %vm379, %v372, %v382
      %s385 = sadd.s32 %s124, 1
      %s386 = sadd.s32 %s123, 1
      %s387 = smul.u32 %s386, 8
      %s388 = scalar_lea.vmem [#allocation7], %s387
      %v389 = vld [vmem:[%s388] sm:$0xff]
      %v390 = vsel %vm128, %v257, 0
      %392 = vmatprep.subr.mxu0 0.0
      %393 = vmatpush1.msra.mxu0 %v82
      %394 = vmatprep.subr.mxu0 0.0
      %395 = vmatpush1.msra.mxu0 %v83
      %396 = vmatprep.subr.mxu0 0.0
      %397 = vmatpush1.msra.mxu0 %v84
      %398 = vmatprep.subr.mxu0 0.0
      %399 = vmatpush1.msra.mxu0 %v85
      %400 = vmatprep.subr.mxu0 0.0
      %401 = vmatpush1.msra.mxu0 0.0
      %402 = vmatprep.subr.mxu0 0.0
      %403 = vmatpush1.msra.mxu0 0.0
      %404 = vmatprep.subr.mxu0 0.0
      %405 = vmatpush1.msra.mxu0 0.0
      %406 = vmatprep.subr.mxu0 0.0
      %407 = vmatpush1.msra.mxu0 0.0
      %408 = vmatprep.subr.mxu0 0.0
      %409 = vmatpush1.msra.mxu0 0.0
      %410 = vmatprep.subr.mxu0 0.0
      %411 = vmatpush1.msra.mxu0 0.0
      %412 = vmatprep.subr.mxu0 0.0
      %413 = vmatpush1.msra.mxu0 0.0
      %414 = vmatprep.subr.mxu0 0.0
      %415 = vmatpush1.msra.mxu0 0.0
      %416 = vmatprep.subr.mxu0 0.0
      %417 = vmatpush1.msra.mxu0 0.0
      %418 = vmatprep.subr.mxu0 0.0
      %419 = vmatpush1.msra.mxu0 0.0
      %420 = vmatprep.subr.mxu0 0.0
      %421 = vmatpush1.msra.mxu0 0.0
      %422 = vmatprep.subr.mxu0 0.0
      %423 = vmatpush1.msra.mxu0 0.0
      %424 = vmatprep.subr.mxu0 0.0
      %425 = vmatpush1.msra.mxu0 0.0
      %426 = vmatprep.subr.mxu0 0.0
      %427 = vmatpush1.msra.mxu0 0.0
      %428 = vmatprep.subr.mxu0 0.0
      %429 = vmatpush1.msra.mxu0 0.0
      %430 = vmatprep.subr.mxu0 0.0
      %431 = vmatpush1.msra.mxu0 0.0
      %432 = vmatprep.subr.mxu0 0.0
      %433 = vmatpush1.msra.mxu0 0.0
      %434 = vmatprep.subr.mxu0 0.0
      %435 = vmatpush1.msra.mxu0 0.0
      %436 = vmatprep.subr.mxu0 0.0
      %437 = vmatpush1.msra.mxu0 0.0
      %438 = vmatprep.subr.mxu0 0.0
      %439 = vmatpush1.msra.mxu0 0.0
      %440 = vmatprep.subr.mxu0 0.0
      %441 = vmatpush1.msra.mxu0 0.0
      %442 = vmatprep.subr.mxu0 0.0
      %443 = vmatpush1.msra.mxu0 0.0
      %444 = vmatprep.subr.mxu0 0.0
      %445 = vmatpush1.msra.mxu0 0.0
      %446 = vmatprep.subr.mxu0 0.0
      %447 = vmatpush1.msra.mxu0 0.0
      %448 = vmatprep.subr.mxu0 0.0
      %449 = vmatpush1.msra.mxu0 0.0
      %450 = vmatprep.subr.mxu0 0.0
      %451 = vmatpush1.msra.mxu0 0.0
      %452 = vmatprep.subr.mxu0 0.0
      %453 = vmatpush1.msra.mxu0 0.0
      %454 = vmatprep.subr.mxu0 0.0
      %455 = vmatpush1.msra.mxu0 0.0
      %456 = vmatprep.mubr.f32.mxu0 0.0
      %457 = vmatmul.mubr.f32.gmra.mrb[0].mxu0 %v390
      %v458 = vpop.f32.mrb[0].mxu0
      %v459 = vadd.f32 0.0, %v458
      %v460 = vpop.f32.mrb[0].mxu0
      %461 = vdwg.mxu0
      %v462 = vadd.f32 %v389, %v459
      %v463 = vxor.u32 %v462, 2147483648
      %v464 = vmul.f32 %v463, 1.442695
      %v465 = vpow.pop %v464
      %v466 = vadd.f32 %v465, 1.0
      %v467 = vrcp.pop %v466
      %v468 = vmul.f32 1.0, %v467
      %v469 = vtanh.pop %v462
      %v470 = vmul.f32 %v230, %v248
      %v471 = vmul.f32 %v213, %v120
      %v472 = vadd.f32 %v470, %v471
      %v473 = vmul.f32 %v218, %v121
      %v474 = vadd.f32 %v472, %v473
      %v475 = vmul.f32 %v224, %v122
      %v476 = vadd.f32 %v474, %v475
      %478 = vrot.lane.b32.xlu0 %v469, 64
      %v479 = vpop.permute.xlu0 %478
      %v481 = vmul.f32 %v468, %v479
      %483 = vrot.lane.b32.xlu0 %v248, 32
      %v484 = vpop.permute.xlu0 %483
      %v486 = vmul.f32 %v468, %v484
      %488 = vrot.lane.b32.xlu0 %v486, 96
      %v489 = vpop.permute.xlu0 %488
      %v491 = vadd.f32 %v481, %v489
      %v492 = vsub.f32 %v491, %v476
      %v493 = vtanh.pop %v492
      %495 = vrot.lane.b32.xlu0 %v493, 96
      %v496 = vpop.permute.xlu0 %495
      %v498 = vmul.f32 %v468, %v496
      %500 = vrot.lane.b32.xlu0 %v498, 32
      %v501 = vpop.permute.xlu0 %500
      %504 = vrot.lane.b32.xlu0 %v372, 64
      %v505 = vpop.permute.xlu0 %504
      %v507 = vsel %vm128, %v501, %v505
      %v509 = vsel %vm270, %v507, 0
      %511 = vmatprep.subr.mxu0 0.0
      %512 = vmatpush1.msra.mxu0 %v86
      %513 = vmatprep.subr.mxu0 0.0
      %514 = vmatpush1.msra.mxu0 %v87
      %515 = vmatprep.subr.mxu0 0.0
      %516 = vmatpush1.msra.mxu0 %v88
      %517 = vmatprep.subr.mxu0 0.0
      %518 = vmatpush1.msra.mxu0 %v89
      %519 = vmatprep.subr.mxu0 0.0
      %520 = vmatpush1.msra.mxu0 %v90
      %521 = vmatprep.subr.mxu0 0.0
      %522 = vmatpush1.msra.mxu0 %v91
      %523 = vmatprep.subr.mxu0 0.0
      %524 = vmatpush1.msra.mxu0 %v92
      %525 = vmatprep.subr.mxu0 0.0
      %526 = vmatpush1.msra.mxu0 %v93
      %527 = vmatprep.subr.mxu0 0.0
      %528 = vmatpush1.msra.mxu0 0.0
      %529 = vmatprep.subr.mxu0 0.0
      %530 = vmatpush1.msra.mxu0 0.0
      %531 = vmatprep.subr.mxu0 0.0
      %532 = vmatpush1.msra.mxu0 0.0
      %533 = vmatprep.subr.mxu0 0.0
      %534 = vmatpush1.msra.mxu0 0.0
      %535 = vmatprep.subr.mxu0 0.0
      %536 = vmatpush1.msra.mxu0 0.0
      %537 = vmatprep.subr.mxu0 0.0
      %538 = vmatpush1.msra.mxu0 0.0
      %539 = vmatprep.subr.mxu0 0.0
      %540 = vmatpush1.msra.mxu0 0.0
      %541 = vmatprep.subr.mxu0 0.0
      %542 = vmatpush1.msra.mxu0 0.0
      %543 = vmatprep.subr.mxu0 0.0
      %544 = vmatpush1.msra.mxu0 0.0
      %545 = vmatprep.subr.mxu0 0.0
      %546 = vmatpush1.msra.mxu0 0.0
      %547 = vmatprep.subr.mxu0 0.0
      %548 = vmatpush1.msra.mxu0 0.0
      %549 = vmatprep.subr.mxu0 0.0
      %550 = vmatpush1.msra.mxu0 0.0
      %551 = vmatprep.subr.mxu0 0.0
      %552 = vmatpush1.msra.mxu0 0.0
      %553 = vmatprep.subr.mxu0 0.0
      %554 = vmatpush1.msra.mxu0 0.0
      %555 = vmatprep.subr.mxu0 0.0
      %556 = vmatpush1.msra.mxu0 0.0
      %557 = vmatprep.subr.mxu0 0.0
      %558 = vmatpush1.msra.mxu0 0.0
      %559 = vmatprep.subr.mxu0 0.0
      %560 = vmatpush1.msra.mxu0 0.0
      %561 = vmatprep.subr.mxu0 0.0
      %562 = vmatpush1.msra.mxu0 0.0
      %563 = vmatprep.subr.mxu0 0.0
      %564 = vmatpush1.msra.mxu0 0.0
      %565 = vmatprep.subr.mxu0 0.0
      %566 = vmatpush1.msra.mxu0 0.0
      %567 = vmatprep.subr.mxu0 0.0
      %568 = vmatpush1.msra.mxu0 0.0
      %569 = vmatprep.subr.mxu0 0.0
      %570 = vmatpush1.msra.mxu0 0.0
      %571 = vmatprep.subr.mxu0 0.0
      %572 = vmatpush1.msra.mxu0 0.0
      %573 = vmatprep.subr.mxu0 0.0
      %574 = vmatpush1.msra.mxu0 0.0
      %575 = vmatprep.mubr.f32.mxu0 0.0
      %576 = vmatmul.mubr.f32.gmra.mrb[0].mxu0 %v509
      %v577 = vpop.f32.mrb[0].mxu0
      %v578 = vadd.f32 %v268, %v577
      %v579 = vpop.f32.mrb[0].mxu0
      %580 = vdwg.mxu0
      %v581 = vxor.u32 %v578, 2147483648
      %v582 = vmul.f32 %v581, 1.442695
      %v583 = vpow.pop %v582
      %v584 = vadd.f32 %v583, 1.0
      %v585 = vrcp.pop %v584
      %v586 = vmul.f32 1.0, %v585
      %v587 = vtanh.pop %v578
      %v588 = vmul.f32 %v586, %v365
      %590 = vrot.lane.b32.xlu0 %v587, 64
      %v591 = vpop.permute.xlu0 %590
      %v593 = vmul.f32 %v586, %v591
      %595 = vrot.lane.b32.xlu0 %v593, 32
      %v596 = vpop.permute.xlu0 %595
      %v598 = vadd.f32 %v588, %v596
      %v599 = vtanh.pop %v598
      %601 = vrot.lane.b32.xlu0 %v599, 64
      %v602 = vpop.permute.xlu0 %601
      %v604 = vmul.f32 %v586, %v602
      %v605 = vtanh.pop %v604
      %v606 = vstv %s385
      %vm607 = vcmp.eq.s32.totalorder %v96, %v606
      %v608 = vsel %vm607, 1, 0
      %609 = vset.pattern.permute.xlu0 0
      %610 = vperm.xlu0 %609, %v608
      %v611 = vpop.permute.xlu0 %610
      %vm612 = vcmp.eq.s32.totalorder %v611, 1
      %v613 = vsel %vm612, %v605, %v384
      %s614 = sadd.s32 %s124, 2
      %s615 = sadd.s32 %s123, 2
      %s616 = smul.u32 %s615, 8
      %s617 = scalar_lea.vmem [#allocation7], %s616
      %v618 = vld [vmem:[%s617] sm:$0xff]
      %v619 = vsel %vm128, %v501, 0
      %621 = vmatprep.subr.mxu0 0.0
      %622 = vmatpush1.msra.mxu0 %v82
      %623 = vmatprep.subr.mxu0 0.0
      %624 = vmatpush1.msra.mxu0 %v83
      %625 = vmatprep.subr.mxu0 0.0
      %626 = vmatpush1.msra.mxu0 %v84
      %627 = vmatprep.subr.mxu0 0.0
      %628 = vmatpush1.msra.mxu0 %v85
      %629 = vmatprep.subr.mxu0 0.0
      %630 = vmatpush1.msra.mxu0 0.0
      %631 = vmatprep.subr.mxu0 0.0
      %632 = vmatpush1.msra.mxu0 0.0
      %633 = vmatprep.subr.mxu0 0.0
      %634 = vmatpush1.msra.mxu0 0.0
      %635 = vmatprep.subr.mxu0 0.0
      %636 = vmatpush1.msra.mxu0 0.0
      %637 = vmatprep.subr.mxu0 0.0
      %638 = vmatpush1.msra.mxu0 0.0
      %639 = vmatprep.subr.mxu0 0.0
      %640 = vmatpush1.msra.mxu0 0.0
      %641 = vmatprep.subr.mxu0 0.0
      %642 = vmatpush1.msra.mxu0 0.0
      %643 = vmatprep.subr.mxu0 0.0
      %644 = vmatpush1.msra.mxu0 0.0
      %645 = vmatprep.subr.mxu0 0.0
      %646 = vmatpush1.msra.mxu0 0.0
      %647 = vmatprep.subr.mxu0 0.0
      %648 = vmatpush1.msra.mxu0 0.0
      %649 = vmatprep.subr.mxu0 0.0
      %650 = vmatpush1.msra.mxu0 0.0
      %651 = vmatprep.subr.mxu0 0.0
      %652 = vmatpush1.msra.mxu0 0.0
      %653 = vmatprep.subr.mxu0 0.0
      %654 = vmatpush1.msra.mxu0 0.0
      %655 = vmatprep.subr.mxu0 0.0
      %656 = vmatpush1.msra.mxu0 0.0
      %657 = vmatprep.subr.mxu0 0.0
      %658 = vmatpush1.msra.mxu0 0.0
      %659 = vmatprep.subr.mxu0 0.0
      %660 = vmatpush1.msra.mxu0 0.0
      %661 = vmatprep.subr.mxu0 0.0
      %662 = vmatpush1.msra.mxu0 0.0
      %663 = vmatprep.subr.mxu0 0.0
      %664 = vmatpush1.msra.mxu0 0.0
      %665 = vmatprep.subr.mxu0 0.0
      %666 = vmatpush1.msra.mxu0 0.0
      %667 = vmatprep.subr.mxu0 0.0
      %668 = vmatpush1.msra.mxu0 0.0
      %669 = vmatprep.subr.mxu0 0.0
      %670 = vmatpush1.msra.mxu0 0.0
      %671 = vmatprep.subr.mxu0 0.0
      %672 = vmatpush1.msra.mxu0 0.0
      %673 = vmatprep.subr.mxu0 0.0
      %674 = vmatpush1.msra.mxu0 0.0
      %675 = vmatprep.subr.mxu0 0.0
      %676 = vmatpush1.msra.mxu0 0.0
      %677 = vmatprep.subr.mxu0 0.0
      %678 = vmatpush1.msra.mxu0 0.0
      %679 = vmatprep.subr.mxu0 0.0
      %680 = vmatpush1.msra.mxu0 0.0
      %681 = vmatprep.subr.mxu0 0.0
      %682 = vmatpush1.msra.mxu0 0.0
      %683 = vmatprep.subr.mxu0 0.0
      %684 = vmatpush1.msra.mxu0 0.0
      %685 = vmatprep.mubr.f32.mxu0 0.0
      %686 = vmatmul.mubr.f32.gmra.mrb[0].mxu0 %v619
      %v687 = vpop.f32.mrb[0].mxu0
      %v688 = vadd.f32 0.0, %v687
      %v689 = vpop.f32.mrb[0].mxu0
      %690 = vdwg.mxu0
      %v691 = vadd.f32 %v618, %v688
      %v692 = vxor.u32 %v691, 2147483648
      %v693 = vmul.f32 %v692, 1.442695
      %v694 = vpow.pop %v693
      %v695 = vadd.f32 %v694, 1.0
      %v696 = vrcp.pop %v695
      %v697 = vmul.f32 1.0, %v696
      %v698 = vtanh.pop %v691
      %v699 = vmul.f32 %v224, %v248
      %v700 = vmul.f32 %v230, %v492
      %v701 = vadd.f32 %v699, %v700
      %v702 = vmul.f32 %v213, %v121
      %v703 = vadd.f32 %v701, %v702
      %v704 = vmul.f32 %v218, %v122
      %v705 = vadd.f32 %v703, %v704
      %707 = vrot.lane.b32.xlu0 %v698, 64
      %v708 = vpop.permute.xlu0 %707
      %v710 = vmul.f32 %v697, %v708
      %712 = vrot.lane.b32.xlu0 %v492, 32
      %v713 = vpop.permute.xlu0 %712
      %v715 = vmul.f32 %v697, %v713
      %717 = vrot.lane.b32.xlu0 %v715, 96
      %v718 = vpop.permute.xlu0 %717
      %v720 = vadd.f32 %v710, %v718
      %v721 = vsub.f32 %v720, %v705
      %v722 = vtanh.pop %v721
      %724 = vrot.lane.b32.xlu0 %v722, 96
      %v725 = vpop.permute.xlu0 %724
      %v727 = vmul.f32 %v697, %v725
      %729 = vrot.lane.b32.xlu0 %v727, 32
      %v730 = vpop.permute.xlu0 %729
      %733 = vrot.lane.b32.xlu0 %v605, 64
      %v734 = vpop.permute.xlu0 %733
      %v736 = vsel %vm128, %v730, %v734
      %v738 = vsel %vm270, %v736, 0
      %740 = vmatprep.subr.mxu0 0.0
      %741 = vmatpush1.msra.mxu0 %v86
      %742 = vmatprep.subr.mxu0 0.0
      %743 = vmatpush1.msra.mxu0 %v87
      %744 = vmatprep.subr.mxu0 0.0
      %745 = vmatpush1.msra.mxu0 %v88
      %746 = vmatprep.subr.mxu0 0.0
      %747 = vmatpush1.msra.mxu0 %v89
      %748 = vmatprep.subr.mxu0 0.0
      %749 = vmatpush1.msra.mxu0 %v90
      %750 = vmatprep.subr.mxu0 0.0
      %751 = vmatpush1.msra.mxu0 %v91
      %752 = vmatprep.subr.mxu0 0.0
      %753 = vmatpush1.msra.mxu0 %v92
      %754 = vmatprep.subr.mxu0 0.0
      %755 = vmatpush1.msra.mxu0 %v93
      %756 = vmatprep.subr.mxu0 0.0
      %757 = vmatpush1.msra.mxu0 0.0
      %758 = vmatprep.subr.mxu0 0.0
      %759 = vmatpush1.msra.mxu0 0.0
      %760 = vmatprep.subr.mxu0 0.0
      %761 = vmatpush1.msra.mxu0 0.0
      %762 = vmatprep.subr.mxu0 0.0
      %763 = vmatpush1.msra.mxu0 0.0
      %764 = vmatprep.subr.mxu0 0.0
      %765 = vmatpush1.msra.mxu0 0.0
      %766 = vmatprep.subr.mxu0 0.0
      %767 = vmatpush1.msra.mxu0 0.0
      %768 = vmatprep.subr.mxu0 0.0
      %769 = vmatpush1.msra.mxu0 0.0
      %770 = vmatprep.subr.mxu0 0.0
      %771 = vmatpush1.msra.mxu0 0.0
      %772 = vmatprep.subr.mxu0 0.0
      %773 = vmatpush1.msra.mxu0 0.0
      %774 = vmatprep.subr.mxu0 0.0
      %775 = vmatpush1.msra.mxu0 0.0
      %776 = vmatprep.subr.mxu0 0.0
      %777 = vmatpush1.msra.mxu0 0.0
      %778 = vmatprep.subr.mxu0 0.0
      %779 = vmatpush1.msra.mxu0 0.0
      %780 = vmatprep.subr.mxu0 0.0
      %781 = vmatpush1.msra.mxu0 0.0
      %782 = vmatprep.subr.mxu0 0.0
      %783 = vmatpush1.msra.mxu0 0.0
      %784 = vmatprep.subr.mxu0 0.0
      %785 = vmatpush1.msra.mxu0 0.0
      %786 = vmatprep.subr.mxu0 0.0
      %787 = vmatpush1.msra.mxu0 0.0
      %788 = vmatprep.subr.mxu0 0.0
      %789 = vmatpush1.msra.mxu0 0.0
      %790 = vmatprep.subr.mxu0 0.0
      %791 = vmatpush1.msra.mxu0 0.0
      %792 = vmatprep.subr.mxu0 0.0
      %793 = vmatpush1.msra.mxu0 0.0
      %794 = vmatprep.subr.mxu0 0.0
      %795 = vmatpush1.msra.mxu0 0.0
      %796 = vmatprep.subr.mxu0 0.0
      %797 = vmatpush1.msra.mxu0 0.0
      %798 = vmatprep.subr.mxu0 0.0
      %799 = vmatpush1.msra.mxu0 0.0
      %800 = vmatprep.subr.mxu0 0.0
      %801 = vmatpush1.msra.mxu0 0.0
      %802 = vmatprep.subr.mxu0 0.0
      %803 = vmatpush1.msra.mxu0 0.0
      %804 = vmatprep.mubr.f32.mxu0 0.0
      %805 = vmatmul.mubr.f32.gmra.mrb[0].mxu0 %v738
      %v806 = vpop.f32.mrb[0].mxu0
      %v807 = vadd.f32 %v268, %v806
      %v808 = vpop.f32.mrb[0].mxu0
      %809 = vdwg.mxu0
      %v810 = vxor.u32 %v807, 2147483648
      %v811 = vmul.f32 %v810, 1.442695
      %v812 = vpow.pop %v811
      %v813 = vadd.f32 %v812, 1.0
      %v814 = vrcp.pop %v813
      %v815 = vmul.f32 1.0, %v814
      %v816 = vtanh.pop %v807
      %v817 = vmul.f32 %v815, %v598
      %819 = vrot.lane.b32.xlu0 %v816, 64
      %v820 = vpop.permute.xlu0 %819
      %v822 = vmul.f32 %v815, %v820
      %824 = vrot.lane.b32.xlu0 %v822, 32
      %v825 = vpop.permute.xlu0 %824
      %v827 = vadd.f32 %v817, %v825
      %v828 = vtanh.pop %v827
      %830 = vrot.lane.b32.xlu0 %v828, 64
      %v831 = vpop.permute.xlu0 %830
      %v833 = vmul.f32 %v815, %v831
      %v834 = vtanh.pop %v833
      %v835 = vstv %s614
      %vm836 = vcmp.eq.s32.totalorder %v96, %v835
      %v837 = vsel %vm836, 1, 0
      %838 = vset.pattern.permute.xlu0 0
      %839 = vperm.xlu0 %838, %v837
      %v840 = vpop.permute.xlu0 %839
      %vm841 = vcmp.eq.s32.totalorder %v840, 1
      %v842 = vsel %vm841, %v834, %v613
      %s843 = sadd.s32 %s124, 3
      %s844 = sadd.s32 %s123, 3
      %s845 = smul.u32 %s844, 8
      %s846 = scalar_lea.vmem [#allocation7], %s845
      %v847 = vld [vmem:[%s846] sm:$0xff]
      %v848 = vsel %vm128, %v730, 0
      %850 = vmatprep.subr.mxu0 0.0
      %851 = vmatpush1.msra.mxu0 %v82
      %852 = vmatprep.subr.mxu0 0.0
      %853 = vmatpush1.msra.mxu0 %v83
      %854 = vmatprep.subr.mxu0 0.0
      %855 = vmatpush1.msra.mxu0 %v84
      %856 = vmatprep.subr.mxu0 0.0
      %857 = vmatpush1.msra.mxu0 %v85
      %858 = vmatprep.subr.mxu0 0.0
      %859 = vmatpush1.msra.mxu0 0.0
      %860 = vmatprep.subr.mxu0 0.0
      %861 = vmatpush1.msra.mxu0 0.0
      %862 = vmatprep.subr.mxu0 0.0
      %863 = vmatpush1.msra.mxu0 0.0
      %864 = vmatprep.subr.mxu0 0.0
      %865 = vmatpush1.msra.mxu0 0.0
      %866 = vmatprep.subr.mxu0 0.0
      %867 = vmatpush1.msra.mxu0 0.0
      %868 = vmatprep.subr.mxu0 0.0
      %869 = vmatpush1.msra.mxu0 0.0
      %870 = vmatprep.subr.mxu0 0.0
      %871 = vmatpush1.msra.mxu0 0.0
      %872 = vmatprep.subr.mxu0 0.0
      %873 = vmatpush1.msra.mxu0 0.0
      %874 = vmatprep.subr.mxu0 0.0
      %875 = vmatpush1.msra.mxu0 0.0
      %876 = vmatprep.subr.mxu0 0.0
      %877 = vmatpush1.msra.mxu0 0.0
      %878 = vmatprep.subr.mxu0 0.0
      %879 = vmatpush1.msra.mxu0 0.0
      %880 = vmatprep.subr.mxu0 0.0
      %881 = vmatpush1.msra.mxu0 0.0
      %882 = vmatprep.subr.mxu0 0.0
      %883 = vmatpush1.msra.mxu0 0.0
      %884 = vmatprep.subr.mxu0 0.0
      %885 = vmatpush1.msra.mxu0 0.0
      %886 = vmatprep.subr.mxu0 0.0
      %887 = vmatpush1.msra.mxu0 0.0
      %888 = vmatprep.subr.mxu0 0.0
      %889 = vmatpush1.msra.mxu0 0.0
      %890 = vmatprep.subr.mxu0 0.0
      %891 = vmatpush1.msra.mxu0 0.0
      %892 = vmatprep.subr.mxu0 0.0
      %893 = vmatpush1.msra.mxu0 0.0
      %894 = vmatprep.subr.mxu0 0.0
      %895 = vmatpush1.msra.mxu0 0.0
      %896 = vmatprep.subr.mxu0 0.0
      %897 = vmatpush1.msra.mxu0 0.0
      %898 = vmatprep.subr.mxu0 0.0
      %899 = vmatpush1.msra.mxu0 0.0
      %900 = vmatprep.subr.mxu0 0.0
      %901 = vmatpush1.msra.mxu0 0.0
      %902 = vmatprep.subr.mxu0 0.0
      %903 = vmatpush1.msra.mxu0 0.0
      %904 = vmatprep.subr.mxu0 0.0
      %905 = vmatpush1.msra.mxu0 0.0
      %906 = vmatprep.subr.mxu0 0.0
      %907 = vmatpush1.msra.mxu0 0.0
      %908 = vmatprep.subr.mxu0 0.0
      %909 = vmatpush1.msra.mxu0 0.0
      %910 = vmatprep.subr.mxu0 0.0
      %911 = vmatpush1.msra.mxu0 0.0
      %912 = vmatprep.subr.mxu0 0.0
      %913 = vmatpush1.msra.mxu0 0.0
      %914 = vmatprep.mubr.f32.mxu0 0.0
      %915 = vmatmul.mubr.f32.gmra.mrb[0].mxu0 %v848
      %v916 = vpop.f32.mrb[0].mxu0
      %v917 = vadd.f32 0.0, %v916
      %v918 = vpop.f32.mrb[0].mxu0
      %919 = vdwg.mxu0
      %v920 = vadd.f32 %v847, %v917
      %v921 = vxor.u32 %v920, 2147483648
      %v922 = vmul.f32 %v921, 1.442695
      %v923 = vpow.pop %v922
      %v924 = vadd.f32 %v923, 1.0
      %v925 = vrcp.pop %v924
      %v926 = vmul.f32 1.0, %v925
      %v927 = vtanh.pop %v920
      %v928 = vmul.f32 %v218, %v248
      %v929 = vmul.f32 %v224, %v492
      %v930 = vadd.f32 %v928, %v929
      %v931 = vmul.f32 %v230, %v721
      %v932 = vadd.f32 %v930, %v931
      %v933 = vmul.f32 %v213, %v122
      %v934 = vadd.f32 %v932, %v933
      %936 = vrot.lane.b32.xlu0 %v927, 64
      %v937 = vpop.permute.xlu0 %936
      %v939 = vmul.f32 %v926, %v937
      %941 = vrot.lane.b32.xlu0 %v721, 32
      %v942 = vpop.permute.xlu0 %941
      %v944 = vmul.f32 %v926, %v942
      %946 = vrot.lane.b32.xlu0 %v944, 96
      %v947 = vpop.permute.xlu0 %946
      %v949 = vadd.f32 %v939, %v947
      %v950 = vsub.f32 %v949, %v934
      %v951 = vtanh.pop %v950
      %953 = vrot.lane.b32.xlu0 %v951, 96
      %v954 = vpop.permute.xlu0 %953
      %v956 = vmul.f32 %v926, %v954
      %958 = vrot.lane.b32.xlu0 %v956, 32
      %v959 = vpop.permute.xlu0 %958
      %962 = vrot.lane.b32.xlu0 %v834, 64
      %v963 = vpop.permute.xlu0 %962
      %v965 = vsel %vm128, %v959, %v963
      %v967 = vsel %vm270, %v965, 0
      %969 = vmatprep.subr.mxu0 0.0
      %970 = vmatpush1.msra.mxu0 %v86
      %971 = vmatprep.subr.mxu0 0.0
      %972 = vmatpush1.msra.mxu0 %v87
      %973 = vmatprep.subr.mxu0 0.0
      %974 = vmatpush1.msra.mxu0 %v88
      %975 = vmatprep.subr.mxu0 0.0
      %976 = vmatpush1.msra.mxu0 %v89
      %977 = vmatprep.subr.mxu0 0.0
      %978 = vmatpush1.msra.mxu0 %v90
      %979 = vmatprep.subr.mxu0 0.0
      %980 = vmatpush1.msra.mxu0 %v91
      %981 = vmatprep.subr.mxu0 0.0
      %982 = vmatpush1.msra.mxu0 %v92
      %983 = vmatprep.subr.mxu0 0.0
      %984 = vmatpush1.msra.mxu0 %v93
      %985 = vmatprep.subr.mxu0 0.0
      %986 = vmatpush1.msra.mxu0 0.0
      %987 = vmatprep.subr.mxu0 0.0
      %988 = vmatpush1.msra.mxu0 0.0
      %989 = vmatprep.subr.mxu0 0.0
      %990 = vmatpush1.msra.mxu0 0.0
      %991 = vmatprep.subr.mxu0 0.0
      %992 = vmatpush1.msra.mxu0 0.0
      %993 = vmatprep.subr.mxu0 0.0
      %994 = vmatpush1.msra.mxu0 0.0
      %995 = vmatprep.subr.mxu0 0.0
      %996 = vmatpush1.msra.mxu0 0.0
      %997 = vmatprep.subr.mxu0 0.0
      %998 = vmatpush1.msra.mxu0 0.0
      %999 = vmatprep.subr.mxu0 0.0
      %1000 = vmatpush1.msra.mxu0 0.0
      %1001 = vmatprep.subr.mxu0 0.0
      %1002 = vmatpush1.msra.mxu0 0.0
      %1003 = vmatprep.subr.mxu0 0.0
      %1004 = vmatpush1.msra.mxu0 0.0
      %1005 = vmatprep.subr.mxu0 0.0
      %1006 = vmatpush1.msra.mxu0 0.0
      %1007 = vmatprep.subr.mxu0 0.0
      %1008 = vmatpush1.msra.mxu0 0.0
      %1009 = vmatprep.subr.mxu0 0.0
      %1010 = vmatpush1.msra.mxu0 0.0
      %1011 = vmatprep.subr.mxu0 0.0
      %1012 = vmatpush1.msra.mxu0 0.0
      %1013 = vmatprep.subr.mxu0 0.0
      %1014 = vmatpush1.msra.mxu0 0.0
      %1015 = vmatprep.subr.mxu0 0.0
      %1016 = vmatpush1.msra.mxu0 0.0
      %1017 = vmatprep.subr.mxu0 0.0
      %1018 = vmatpush1.msra.mxu0 0.0
      %1019 = vmatprep.subr.mxu0 0.0
      %1020 = vmatpush1.msra.mxu0 0.0
      %1021 = vmatprep.subr.mxu0 0.0
      %1022 = vmatpush1.msra.mxu0 0.0
      %1023 = vmatprep.subr.mxu0 0.0
      %1024 = vmatpush1.msra.mxu0 0.0
      %1025 = vmatprep.subr.mxu0 0.0
      %1026 = vmatpush1.msra.mxu0 0.0
      %1027 = vmatprep.subr.mxu0 0.0
      %1028 = vmatpush1.msra.mxu0 0.0
      %1029 = vmatprep.subr.mxu0 0.0
      %1030 = vmatpush1.msra.mxu0 0.0
      %1031 = vmatprep.subr.mxu0 0.0
      %1032 = vmatpush1.msra.mxu0 0.0
      %1033 = vmatprep.mubr.f32.mxu0 0.0
      %1034 = vmatmul.mubr.f32.gmra.mrb[0].mxu0 %v967
      %v1035 = vpop.f32.mrb[0].mxu0
      %v1036 = vadd.f32 %v268, %v1035
      %v1037 = vpop.f32.mrb[0].mxu0
      %1038 = vdwg.mxu0
      %v1039 = vxor.u32 %v1036, 2147483648
      %v1040 = vmul.f32 %v1039, 1.442695
      %v1041 = vpow.pop %v1040
      %v1042 = vadd.f32 %v1041, 1.0
      %v1043 = vrcp.pop %v1042
      %v1044 = vmul.f32 1.0, %v1043
      %v1045 = vtanh.pop %v1036
      %v1046 = vmul.f32 %v1044, %v827
      %1048 = vrot.lane.b32.xlu0 %v1045, 64
      %v1049 = vpop.permute.xlu0 %1048
      %v1051 = vmul.f32 %v1044, %v1049
      %1053 = vrot.lane.b32.xlu0 %v1051, 32
      %v1054 = vpop.permute.xlu0 %1053
      %v1056 = vadd.f32 %v1046, %v1054
      %v1057 = vtanh.pop %v1056
      %1059 = vrot.lane.b32.xlu0 %v1057, 64
      %v1060 = vpop.permute.xlu0 %1059
      %v1062 = vmul.f32 %v1044, %v1060
      %v1063 = vtanh.pop %v1062
      %v1064 = vstv %s843
      %vm1065 = vcmp.eq.s32.totalorder %v96, %v1064
      %v1066 = vsel %vm1065, 1, 0
      %1067 = vset.pattern.permute.xlu0 0
      %1068 = vperm.xlu0 %1067, %v1066
      %v1069 = vpop.permute.xlu0 %1068
      %vm1070 = vcmp.eq.s32.totalorder %v1069, 1
      %v1071 = vsel %vm1070, %v1063, %v842
      %1073 = vrot.lane.b32.xlu0 %v1063, 32
      %v1074 = vpop.permute.xlu0 %1073
      %1077 = vrot.lane.b32.xlu0 %v1056, 96
      %v1078 = vpop.permute.xlu0 %1077
      %1081 = vrot.lane.b32.xlu0 %v1071, 32
      %v1082 = vpop.permute.xlu0 %1081
    $region54: #{tpu_custom_call.1} parent=1 // loop_footer
      %s114 = sadd.s32 1, %s110
    $region55: #{tpu_custom_call.1} parent=1 // loop_footer_branch
      %109 = sbr.rel target = $region51
    $region56: #{tpu_custom_call.1} parent=1 // loop_exit
      _
    %vm1084 = vcmask 261120
    %1085 = vst.msk [vmem:[#allocation2] sm:$0xff] %vm1084, %v115
    %1086 = vst.msk [vmem:[#allocation4] sm:$0xff] %vm1084, %v116
    %1087 = vst.msk [vmem:[#allocation5] sm:$0xff] %vm1084, %v117
    %1088 = vst.msk [vmem:[#allocation6] sm:$0xff] %vm1084, %v118
    %1089 = vst.msk [vmem:[#allocation3] sm:$0xff] %vm1084, %v119
    %1090 = vst.msk [vmem:[%s103] sm:$0xff] %vm1084, %v120
    %1091 = vst.msk [vmem:[%s105] sm:$0xff] %vm1084, %v121
    %1092 = vst.msk [vmem:[%s107] sm:$0xff] %vm1084, %v122
    // Predicated region
    $region57: #{tpu_custom_call.1} parent=1 // pred_check
      %p1093 = pneg %p69
    $region58: #{tpu_custom_call.1} parent=1 // pred_check_branch
      %1095 = sbr.rel (%p1093) target = $region60
    $region59: #{tpu_custom_call.1} parent=1 // pred_region
      %v1096 = vld [vmem:[%s6] sm:$0xff]
      %v1097 = vld [vmem:[%s6 + $0x8] sm:$0xff]
      %v1098 = vld [vmem:[%s6 + $0x10] sm:$0xff]
      %v1099 = vld [vmem:[%s6 + $0x18] sm:$0xff]
      %v1100 = vld [vmem:[%s7] sm:$0x1]
      %v1102 = vlaneseq
      %v1103 = vshrl.u32 %v1102, 7
      %v1104 = vsub.s32 0, %v1103
      %v1105 = vrot.slane %v1100, %v1104
      %v1108 = vsel %vm1084, %v118, 0
      %1110 = vmatprep.subr.mxu0 0.0
      %1111 = vmatpush1.msra.mxu0 %v1096
      %1112 = vmatprep.subr.mxu0 0.0
      %1113 = vmatpush1.msra.mxu0 %v1097
      %1114 = vmatprep.subr.mxu0 0.0
      %1115 = vmatpush1.msra.mxu0 %v1098
      %1116 = vmatprep.subr.mxu0 0.0
      %1117 = vmatpush1.msra.mxu0 %v1099
      %1118 = vmatprep.subr.mxu0 0.0
      %1119 = vmatpush1.msra.mxu0 0.0
      %1120 = vmatprep.subr.mxu0 0.0
      %1121 = vmatpush1.msra.mxu0 0.0
      %1122 = vmatprep.subr.mxu0 0.0
      %1123 = vmatpush1.msra.mxu0 0.0
      %1124 = vmatprep.subr.mxu0 0.0
      %1125 = vmatpush1.msra.mxu0 0.0
      %1126 = vmatprep.subr.mxu0 0.0
      %1127 = vmatpush1.msra.mxu0 0.0
      %1128 = vmatprep.subr.mxu0 0.0
      %1129 = vmatpush1.msra.mxu0 0.0
      %1130 = vmatprep.subr.mxu0 0.0
      %1131 = vmatpush1.msra.mxu0 0.0
      %1132 = vmatprep.subr.mxu0 0.0
      %1133 = vmatpush1.msra.mxu0 0.0
      %1134 = vmatprep.subr.mxu0 0.0
      %1135 = vmatpush1.msra.mxu0 0.0
      %1136 = vmatprep.subr.mxu0 0.0
      %1137 = vmatpush1.msra.mxu0 0.0
      %1138 = vmatprep.subr.mxu0 0.0
      %1139 = vmatpush1.msra.mxu0 0.0
      %1140 = vmatprep.subr.mxu0 0.0
      %1141 = vmatpush1.msra.mxu0 0.0
      %1142 = vmatprep.subr.mxu0 0.0
      %1143 = vmatpush1.msra.mxu0 0.0
      %1144 = vmatprep.subr.mxu0 0.0
      %1145 = vmatpush1.msra.mxu0 0.0
      %1146 = vmatprep.subr.mxu0 0.0
      %1147 = vmatpush1.msra.mxu0 0.0
      %1148 = vmatprep.subr.mxu0 0.0
      %1149 = vmatpush1.msra.mxu0 0.0
      %1150 = vmatprep.subr.mxu0 0.0
      %1151 = vmatpush1.msra.mxu0 0.0
      %1152 = vmatprep.subr.mxu0 0.0
      %1153 = vmatpush1.msra.mxu0 0.0
      %1154 = vmatprep.subr.mxu0 0.0
      %1155 = vmatpush1.msra.mxu0 0.0
      %1156 = vmatprep.subr.mxu0 0.0
      %1157 = vmatpush1.msra.mxu0 0.0
      %1158 = vmatprep.subr.mxu0 0.0
      %1159 = vmatpush1.msra.mxu0 0.0
      %1160 = vmatprep.subr.mxu0 0.0
      %1161 = vmatpush1.msra.mxu0 0.0
      %1162 = vmatprep.subr.mxu0 0.0
      %1163 = vmatpush1.msra.mxu0 0.0
      %1164 = vmatprep.subr.mxu0 0.0
      %1165 = vmatpush1.msra.mxu0 0.0
      %1166 = vmatprep.subr.mxu0 0.0
      %1167 = vmatpush1.msra.mxu0 0.0
      %1168 = vmatprep.subr.mxu0 0.0
      %1169 = vmatpush1.msra.mxu0 0.0
      %1170 = vmatprep.subr.mxu0 0.0
      %1171 = vmatpush1.msra.mxu0 0.0
      %1172 = vmatprep.subr.mxu0 0.0
      %1173 = vmatpush1.msra.mxu0 0.0
      %1174 = vmatprep.mubr.f32.mxu0 0.0
      %1175 = vmatmul.mubr.f32.gmra.mrb[0].mxu0 %v1108
      %v1176 = vpop.f32.mrb[0].mxu0
      %v1177 = vadd.f32 %v1105, %v1176
      %v1178 = vpop.f32.mrb[0].mxu0
      %1179 = vdwg.mxu0
      %vm1180 = vcmask 39936
      %v1181 = vsel %vm1180, %v1177, -inf
      %1182 = vmax.xlane.f32.xlu0 %v1181
      %v1183 = vpop.xlane.xlu0 %1182
      %v1184 = vsub.f32 %v1177, %v1183
      %v1185 = vmul.f32 %v1184, 1.442695
      %v1186 = vpow.pop %v1185
      %v1187 = vsel %vm1180, %v1186, 0.0
      %1188 = vadd.xlane.f32.xlu0 %v1187
      %v1189 = vpop.xlane.xlu0 %1188
      %v1190 = vlog2.pop %v1189
      %v1191 = vmul.f32 %v1190, 0.6931472
      %v1192 = vadd.f32 %v1191, %v1183
      %v1193 = vsub.f32 %v1177, %v1192
      %1194 = vst.msk [vmem:[#allocation13] sm:$0xff] %vm1180, %v1193
    $region60: #{tpu_custom_call.1} parent=1 // pred_fallthru
      _
    // Predicated region
    $region61: #{tpu_custom_call.1} parent=1 // pred_check
      _
    $region62: #{tpu_custom_call.1} parent=1 // pred_check_branch
      %1196 = sbr.rel (0) target = $region64
    $region63: #{tpu_custom_call.1} parent=1 // pred_region
      %s1198 = ssub.s32 128, 128
      %1199 = vsyncadd [#allocation9], %s1198
      %s1201 = sshll.u32 [#allocation13], 4
      %s1202 = int_to_ptr.vmem [resolvable:$true] %s1201
      %1204 = dma.vmem_to_hbm [thread:$0]  %s1202, 128, %s8, [#allocation9]
    $region64: #{tpu_custom_call.1} parent=1 // pred_fallthru
      _
    // Predicated region
    $region65: #{tpu_custom_call.1} parent=1 // pred_check
      _
    $region66: #{tpu_custom_call.1} parent=1 // pred_check_branch
      %1206 = sbr.rel (0) target = $region68
    $region67: #{tpu_custom_call.1} parent=1 // pred_region
      %1207 = dma.done [#allocation9], 128
    $region68: #{tpu_custom_call.1} parent=1 // pred_fallthru
      _
    %1208 = vsyncpa [#allocation8], 1
    %1209 = vsyncpa [#allocation11], 1
    %1210 = vsyncpa [#allocation9], 1

</llo_original>
